<compile_context>
chip_gen: v7x
topology: tpu7x:2x2x1
jax: 0.10.0
libtpu: 0.0.40
codegen_flags: <defaults>
</compile_context>

<pallas_src>
import functools

import jax
import jax.numpy as jnp
from jax.experimental import pallas as pl
from jax.experimental.pallas import tpu as pltpu


def _round_up(x, m):
    return ((x + m - 1) // m) * m


def _tensorcores_per_chip():
    """2 TensorCores on v7x, 1 on v5e/v6e. Conservative default = 1."""
    try:
        kind = jax.devices()[0].device_kind.lower()
    except Exception:
        return 1
    return 2 if ("v7" in kind or "7x" in kind) else 1


def _vmem_capacity_bytes():
    try:
        return int(pltpu.get_tpu_info().vmem_capacity_bytes)
    except Exception:
        return 64 * 1024 * 1024          # conservative fallback (v7x physical VMEM)


def _gru_chunk_kernel(gi_ref, h0_ref, w_hh_ref, b_hn_ref, out_ref, h_scratch,
                      *, chunk, hidden_pad, unroll):
    """One grid step = one (batch-block, time-chunk). Time-major blocks.

    gi_ref   : (Tc, Bb, 3*Hp) bf16  hoisted x@W_ih^T + folded biases
    h0_ref   : (Bb, Hp)       f32   initial hidden state (grid-invariant block)
    w_hh_ref : (Hp, 3*Hp)     bf16  recurrent weights (grid-invariant block)
    b_hn_ref : (1, Hp)        f32
    out_ref  : (Tc, Bb, Hp)
    h_scratch: (Bb, Hp)       f32   hidden carry across time chunks
    """
    Hp = hidden_pad

    # (Re-)initialize the hidden state at the first time chunk of each batch block.
    # Correctness relies on time being the innermost grid axis marked "arbitrary".
    @pl.when(pl.program_id(1) == 0)
    def _init():
        h_scratch[...] = h0_ref[...]

    w_hh = w_hh_ref[...]                                   # (Hp, 3*Hp) bf16, resident
    # Hoisted out of the unrolled loop (JAX does not CSE broadcast_in_dim).
    b_hn = jnp.broadcast_to(b_hn_ref[...], (h_scratch.shape[0], Hp))

    def step(t, h_prev):
        # Dense, lane/sublane-aligned (Bb, 3*Hp) slab — no strided loads in the hot loop.
        gi_t = gi_ref[t].astype(jnp.float32)
        gh = jnp.dot(h_prev.astype(jnp.bfloat16), w_hh,
                     preferred_element_type=jnp.float32)   # (Bb, 3*Hp) f32
        r = jax.nn.sigmoid(gi_t[:, 0:Hp] + gh[:, 0:Hp])
        z = jax.nn.sigmoid(gi_t[:, Hp:2 * Hp] + gh[:, Hp:2 * Hp])
        n = jnp.tanh(gi_t[:, 2 * Hp:3 * Hp] + r * (gh[:, 2 * Hp:3 * Hp] + b_hn))
        h_new = n + z * (h_prev - n)                       # == (1-z)*n + z*h_prev
        out_ref[t] = h_new.astype(out_ref.dtype)           # dense (Bb, Hp) store
        return h_new

    h_scratch[...] = jax.lax.fori_loop(0, chunk, step, h_scratch[...], unroll=unroll)


def gru_forward(x, weight_ih, weight_hh, bias_ih, bias_hh, h0=None):
    """
    x         : (B, T, n_input)
    weight_ih : (3H, n_input)   PyTorch layout, gate order (r, z, n)
    weight_hh : (3H, H)
    bias_ih   : (3H,)
    bias_hh   : (3H,)
    h0        : optional (1, B, H) initial hidden state (PyTorch convention)
    returns h_all : (B, T, H)
    """
    B, T, n_in = x.shape
    H = weight_hh.shape[1]
    out_dtype = x.dtype
    f32 = jnp.float32

    Hp = _round_up(H, 128)                     # lane-aligned hidden size
    pad_h = Hp - H

    # ---- VMEM budget, derived from the chip's physical capacity (v7x = 64 MiB) ----
    vmem_cap = _vmem_capacity_bytes()
    vmem_limit = int(min(int(0.80 * vmem_cap), 100 * 1024 * 1024))
    vmem_limit = max(vmem_limit, 32 * 1024 * 1024)
    budget = int(0.75 * vmem_limit)

    gi_bytes = 2                               # gi stored bf16
    out_bytes = jnp.dtype(out_dtype).itemsize

    # ---- per-core batch block: split across both TensorCores on v7x when possible ----
    Bb = B
    if _tensorcores_per_chip() >= 2 and B >= 16 and (B // 2) % 8 == 0:
        Bb = B // 2

    def _blocks_bytes(bb, tc):
        # Conservative: count two buffers for every block, including the grid-invariant
        # W_hh / h0 blocks (no per-step re-DMA, but leave room for their allocation).
        gi_blk = 2 * tc * bb * 3 * Hp * gi_bytes
        out_blk = 2 * tc * bb * Hp * out_bytes
        whh = 2 * Hp * 3 * Hp * 2
        small = 3 * bb * Hp * 4 + 2 * Hp * 4   # h0 (x2) + h_scratch + b_hn
        return gi_blk + out_blk + whh + small

    # Shrink the batch block if even a Tc=8 chunk would not fit the budget.
    while _blocks_bytes(Bb, 8) > budget and Bb % 16 == 0:
        Bb //= 2

    # ---- budget-driven time chunk: amortize per-grid-step overhead ----
    tc_cap = 64 if vmem_cap >= (96 << 20) else 32        # smaller chunks on v7x (64 MiB)
    Tc = 8
    while Tc * 2 <= tc_cap and _blocks_bytes(Bb, Tc * 2) <= budget:
        Tc *= 2
    Tc = min(Tc, _round_up(T, 8))
    Tp = _round_up(T, Tc)

    # Partial unroll when the per-step live set clearly exceeds the 64-vreg file.
    unroll = True if Bb * Hp <= 8192 else max(1, min(8, Tc))

    # ---- weights: split gates, transpose, pad each gate to a lane-aligned Hp block ----
    w_ih_g = weight_ih.reshape(3, H, n_in).astype(f32)
    w_hh_g = weight_hh.reshape(3, H, H).astype(f32)
    b_ih_g = bias_ih.reshape(3, H).astype(f32)
    b_hh_g = bias_hh.reshape(3, H).astype(f32)

    # W_ih^T as (n_in, 3*Hp), W_hh^T as (Hp, 3*Hp); gates at lane offsets 0, Hp, 2*Hp.
    w_ih_t = jnp.pad(jnp.transpose(w_ih_g, (2, 0, 1)),
                     ((0, 0), (0, 0), (0, pad_h))).reshape(n_in, 3 * Hp)
    w_hh_t = jnp.pad(jnp.transpose(w_hh_g, (2, 0, 1)),
                     ((0, pad_h), (0, 0), (0, pad_h))).reshape(Hp, 3 * Hp)
    w_hh_bf16 = w_hh_t.astype(jnp.bfloat16)

    # Folded biases: r/z absorb input+hidden bias; n keeps b_in here, b_hn in-kernel.
    b_fold = jnp.stack([b_ih_g[0] + b_hh_g[0],
                        b_ih_g[1] + b_hh_g[1],
                        b_ih_g[2]])
    b_fold = jnp.pad(b_fold, ((0, 0), (0, pad_h))).reshape(1, 1, 3 * Hp)
    b_hn = jnp.pad(b_hh_g[2], (0, pad_h)).reshape(1, Hp)

    # ---- hoisted input projection, TIME-MAJOR ----
    # Transpose x to (T, B, n_in) before the projection: the transpose only touches the
    # tiny n_in stream; gi / out stay time-major so per-step kernel accesses are dense.
    x_tm = jnp.transpose(x, (1, 0, 2)).astype(jnp.bfloat16)        # (T, B, n_in)
    if Tp != T:
        x_tm = jnp.pad(x_tm, ((0, Tp - T), (0, 0), (0, 0)))
    gi = (jnp.dot(x_tm.reshape(Tp * B, n_in),
                  w_ih_t.astype(jnp.bfloat16),
                  preferred_element_type=f32).reshape(Tp, B, 3 * Hp)
          + b_fold).astype(jnp.bfloat16)                           # (Tp, B, 3*Hp) bf16

    # ---- initial hidden state (zero-padded lanes stay exactly zero through the GRU) ----
    if h0 is None:
        h0_p = jnp.zeros((B, Hp), f32)
    else:
        h0_p = jnp.pad(h0.reshape(B, H).astype(f32), ((0, 0), (0, pad_h)))

    kernel = functools.partial(_gru_chunk_kernel, chunk=Tc, hidden_pad=Hp, unroll=unroll)
    grid = (B // Bb, Tp // Tc)     # (batch blocks: parallel, time chunks: serial/inner)

    out = pl.pallas_call(
        kernel,
        out_shape=jax.ShapeDtypeStruct((Tp, B, Hp), out_dtype),
        grid_spec=pltpu.PrefetchScalarGridSpec(
            num_scalar_prefetch=0,
            grid=grid,
            in_specs=[
                pl.BlockSpec((Tc, Bb, 3 * Hp), lambda b, t: (t, b, 0)),   # gi chunk
                pl.BlockSpec((Bb, Hp), lambda b, t: (b, 0)),              # h0
                pl.BlockSpec((Hp, 3 * Hp), lambda b, t: (0, 0)),          # W_hh^T bf16
                pl.BlockSpec((1, Hp), lambda b, t: (0, 0)),               # b_hn
            ],
            out_specs=pl.BlockSpec((Tc, Bb, Hp), lambda b, t: (t, b, 0)),
            scratch_shapes=[pltpu.VMEM((Bb, Hp), jnp.float32)],           # hidden carry
        ),
        compiler_params=pltpu.CompilerParams(
            dimension_semantics=("parallel", "arbitrary"),   # batch parallel, time serial
            vmem_limit_bytes=vmem_limit,
        ),
    )(gi, h0_p, w_hh_bf16, b_hn)

    # NOTE: padded timesteps (T..Tp) keep updating the carried hidden state; this is
    # harmless because only the first T steps are returned (no final-h output here).
    return jnp.transpose(out[:T, :, :H], (1, 0, 2))                 # (B, T, H)


class GRURNNPallas:
    """Mirror of the PyTorch GRURNN wrapper. bidirectional=False only."""

    def __init__(self, hp: dict, key):
        self.n_in = hp['n_input']
        self.n_rnn = hp['n_rnn']
        self.bidir = hp.get('bidirectional', False)
        if self.bidir:
            # TODO(synk): bidirectional GRU (second reversed-time pass + concat) not implemented.
            raise NotImplementedError("bidirectional GRU not supported in this kernel")
        self.n_out = self.n_rnn

        H, I = self.n_rnn, self.n_in
        k = 1.0 / jnp.sqrt(jnp.float32(H))
        ks = jax.random.split(key, 4)
        # Same shapes / uniform(-1/sqrt(H), 1/sqrt(H)) init as nn.GRU.
        self.weight_ih = jax.random.uniform(ks[0], (3 * H, I), jnp.float32, -k, k)
        self.weight_hh = jax.random.uniform(ks[1], (3 * H, H), jnp.float32, -k, k)
        self.bias_ih = jax.random.uniform(ks[2], (3 * H,), jnp.float32, -k, k)
        self.bias_hh = jax.random.uniform(ks[3], (3 * H,), jnp.float32, -k, k)

    def __call__(self, x, h0=None):
        return gru_forward(x, self.weight_ih, self.weight_hh,
                           self.bias_ih, self.bias_hh, h0)


if __name__ == "__main__":
    key = jax.random.PRNGKey(0)
    k_param, k_x, k_h0 = jax.random.split(key, 3)

    hp = {'n_input': 4, 'n_rnn': 32, 'bidirectional': False}
    B, T = 2, 8

    model = GRURNNPallas(hp, k_param)

    x = jax.random.normal(k_x, (B, T, hp['n_input']), dtype=jnp.float32)
    h0 = jax.random.normal(k_h0, (1, B, hp['n_rnn']), dtype=jnp.float32)

    h_all = model(x, h0)
    jax.block_until_ready(h_all)
    assert h_all.shape == (B, T, hp['n_rnn']), h_all.shape
    assert bool(jnp.all(jnp.isfinite(h_all)))

    print("KERNEL_OK")
</pallas_src>

<mosaic_0001>
module attributes {stable_mosaic.version = 11 : i64} {
  func.func @_gru_chunk_kernel(%arg0: i32, %arg1: i32, %arg2: memref<8x2x384xbf16, #tpu.memory_space<vmem>>, %arg3: memref<2x128xf32, #tpu.memory_space<vmem>>, %arg4: memref<128x384xbf16, #tpu.memory_space<vmem>>, %arg5: memref<1x128xf32, #tpu.memory_space<vmem>>, %arg6: memref<8x2x128xf32, #tpu.memory_space<vmem>>, %arg7: memref<2x128xf32, #tpu.memory_space<vmem>>) attributes {dimension_semantics = [#tpu.dimension_semantics<parallel>, #tpu.dimension_semantics<arbitrary>], iteration_bounds = array<i64: 1, 1>, scalar_prefetch = 0 : i64, scratch_operands = 1 : i64, tpu.core_type = #tpu.core_type<tc>, window_params = [{transform_indices = @transform_0, window_bounds = array<i64: 8, 2, 384>}, {transform_indices = @transform_1, window_bounds = array<i64: 2, 128>}, {pipeline_mode = #tpu.pipeline_mode<synchronous>, transform_indices = @transform_2, window_bounds = array<i64: 128, 384>}, {pipeline_mode = #tpu.pipeline_mode<synchronous>, transform_indices = @transform_3, window_bounds = array<i64: 1, 128>}, {transform_indices = @transform_4, window_bounds = array<i64: 8, 2, 128>}]} {
    %c0_i32 = arith.constant 0 : i32
    %0 = arith.cmpi eq, %arg1, %c0_i32 : i32
    %1 = arith.extui %0 : i1 to i32
    %c0_i32_0 = arith.constant 0 : i32
    %2 = arith.cmpi ne, %1, %c0_i32_0 : i32
    scf.if %2 {
      %c0_64 = arith.constant 0 : index
      %c0_65 = arith.constant 0 : index
      %289 = vector.load %arg3[%c0_64, %c0_65] : memref<2x128xf32, #tpu.memory_space<vmem>>, vector<2x128xf32>
      %c0_66 = arith.constant 0 : index
      %c0_67 = arith.constant 0 : index
      %290 = vector.load %arg7[%c0_66, %c0_67] : memref<2x128xf32, #tpu.memory_space<vmem>>, vector<2x128xf32>
      tpu.vector_store %arg7[%c0_66, %c0_67], %289 {strides = array<i32>} : memref<2x128xf32, #tpu.memory_space<vmem>>, vector<2x128xf32>,
    } else {
    }
    %c0 = arith.constant 0 : index
    %c0_1 = arith.constant 0 : index
    %3 = vector.load %arg4[%c0, %c0_1] : memref<128x384xbf16, #tpu.memory_space<vmem>>, vector<128x384xbf16>
    %c0_2 = arith.constant 0 : index
    %c0_3 = arith.constant 0 : index
    %4 = vector.load %arg5[%c0_2, %c0_3] : memref<1x128xf32, #tpu.memory_space<vmem>>, vector<1x128xf32>
    %5 = vector.shape_cast %4 : vector<1x128xf32> to vector<1x128xf32>
    %6 = vector.broadcast %5 : vector<1x128xf32> to vector<2x128xf32>
    %c0_4 = arith.constant 0 : index
    %c0_5 = arith.constant 0 : index
    %7 = vector.load %arg7[%c0_4, %c0_5] : memref<2x128xf32, #tpu.memory_space<vmem>>, vector<2x128xf32>
    %c0_i32_6 = arith.constant 0 : i32
    %8 = arith.index_cast %c0_i32_6 : i32 to index
    %c0_7 = arith.constant 0 : index
    %c0_8 = arith.constant 0 : index
    %9 = vector.load %arg2[%8, %c0_7, %c0_8] : memref<8x2x384xbf16, #tpu.memory_space<vmem>>, vector<1x2x384xbf16>
    %10 = vector.shape_cast %9 : vector<1x2x384xbf16> to vector<2x384xbf16>
    %11 = arith.extf %10 : vector<2x384xbf16> to vector<2x384xf32>
    %12 = arith.truncf %7 : vector<2x128xf32> to vector<2x128xbf16>
    %cst = arith.constant dense<0.000000e+00> : vector<2x384xf32>
    %13 = tpu.matmul %12, %3, %cst {dimension_numbers = #tpu.dot_dimension_numbers<[1], [0], [0], [1], [0, 0, 1, 1], [], []>} : vector<2x128xbf16>, vector<128x384xbf16>, vector<2x384xf32> -> vector<2x384xf32>
    %14 = vector.extract_strided_slice %11 {offsets = [0, 0], sizes = [2, 128], strides = [1, 1]} : vector<2x384xf32> to vector<2x128xf32>
    %15 = vector.extract_strided_slice %13 {offsets = [0, 0], sizes = [2, 128], strides = [1, 1]} : vector<2x384xf32> to vector<2x128xf32>
    %16 = arith.addf %14, %15 : vector<2x128xf32>
    %17 = arith.negf %16 : vector<2x128xf32>
    %18 = math.exp %17 : vector<2x128xf32>
    %cst_9 = arith.constant 1.000000e+00 : f32
    %19 = vector.broadcast %cst_9 : f32 to vector<2x128xf32>
    %20 = arith.addf %19, %18 : vector<2x128xf32>
    %21 = arith.divf %19, %20 : vector<2x128xf32>
    %22 = vector.extract_strided_slice %11 {offsets = [0, 128], sizes = [2, 128], strides = [1, 1]} : vector<2x384xf32> to vector<2x128xf32>
    %23 = vector.extract_strided_slice %13 {offsets = [0, 128], sizes = [2, 128], strides = [1, 1]} : vector<2x384xf32> to vector<2x128xf32>
    %24 = arith.addf %22, %23 : vector<2x128xf32>
    %25 = arith.negf %24 : vector<2x128xf32>
    %26 = math.exp %25 : vector<2x128xf32>
    %cst_10 = arith.constant 1.000000e+00 : f32
    %27 = vector.broadcast %cst_10 : f32 to vector<2x128xf32>
    %28 = arith.addf %27, %26 : vector<2x128xf32>
    %29 = arith.divf %27, %28 : vector<2x128xf32>
    %30 = vector.extract_strided_slice %11 {offsets = [0, 256], sizes = [2, 128], strides = [1, 1]} : vector<2x384xf32> to vector<2x128xf32>
    %31 = vector.extract_strided_slice %13 {offsets = [0, 256], sizes = [2, 128], strides = [1, 1]} : vector<2x384xf32> to vector<2x128xf32>
    %32 = arith.addf %31, %6 : vector<2x128xf32>
    %33 = arith.mulf %21, %32 : vector<2x128xf32>
    %34 = arith.addf %30, %33 : vector<2x128xf32>
    %35 = math.tanh %34 : vector<2x128xf32>
    %36 = arith.subf %7, %35 : vector<2x128xf32>
    %37 = arith.mulf %29, %36 : vector<2x128xf32>
    %38 = arith.addf %35, %37 : vector<2x128xf32>
    %39 = arith.index_cast %c0_i32_6 : i32 to index
    %c0_11 = arith.constant 0 : index
    %c0_12 = arith.constant 0 : index
    %40 = vector.load %arg6[%39, %c0_11, %c0_12] : memref<8x2x128xf32, #tpu.memory_space<vmem>>, vector<1x2x128xf32>
    %41 = vector.shape_cast %40 : vector<1x2x128xf32> to vector<2x128xf32>
    %42 = vector.shape_cast %38 : vector<2x128xf32> to vector<1x2x128xf32>
    tpu.vector_store %arg6[%39, %c0_11, %c0_12], %42 {strides = array<i32>} : memref<8x2x128xf32, #tpu.memory_space<vmem>>, vector<1x2x128xf32>,
    %c1_i32 = arith.constant 1 : i32
    %43 = arith.index_cast %c1_i32 : i32 to index
    %c0_13 = arith.constant 0 : index
    %c0_14 = arith.constant 0 : index
    %44 = vector.load %arg2[%43, %c0_13, %c0_14] : memref<8x2x384xbf16, #tpu.memory_space<vmem>>, vector<1x2x384xbf16>
    %45 = vector.shape_cast %44 : vector<1x2x384xbf16> to vector<2x384xbf16>
    %46 = arith.extf %45 : vector<2x384xbf16> to vector<2x384xf32>
    %47 = arith.truncf %38 : vector<2x128xf32> to vector<2x128xbf16>
    %cst_15 = arith.constant dense<0.000000e+00> : vector<2x384xf32>
    %48 = tpu.matmul %47, %3, %cst_15 {dimension_numbers = #tpu.dot_dimension_numbers<[1], [0], [0], [1], [0, 0, 1, 1], [], []>} : vector<2x128xbf16>, vector<128x384xbf16>, vector<2x384xf32> -> vector<2x384xf32>
    %49 = vector.extract_strided_slice %46 {offsets = [0, 0], sizes = [2, 128], strides = [1, 1]} : vector<2x384xf32> to vector<2x128xf32>
    %50 = vector.extract_strided_slice %48 {offsets = [0, 0], sizes = [2, 128], strides = [1, 1]} : vector<2x384xf32> to vector<2x128xf32>
    %51 = arith.addf %49, %50 : vector<2x128xf32>
    %52 = arith.negf %51 : vector<2x128xf32>
    %53 = math.exp %52 : vector<2x128xf32>
    %cst_16 = arith.constant 1.000000e+00 : f32
    %54 = vector.broadcast %cst_16 : f32 to vector<2x128xf32>
    %55 = arith.addf %54, %53 : vector<2x128xf32>
    %56 = arith.divf %54, %55 : vector<2x128xf32>
    %57 = vector.extract_strided_slice %46 {offsets = [0, 128], sizes = [2, 128], strides = [1, 1]} : vector<2x384xf32> to vector<2x128xf32>
    %58 = vector.extract_strided_slice %48 {offsets = [0, 128], sizes = [2, 128], strides = [1, 1]} : vector<2x384xf32> to vector<2x128xf32>
    %59 = arith.addf %57, %58 : vector<2x128xf32>
    %60 = arith.negf %59 : vector<2x128xf32>
    %61 = math.exp %60 : vector<2x128xf32>
    %cst_17 = arith.constant 1.000000e+00 : f32
    %62 = vector.broadcast %cst_17 : f32 to vector<2x128xf32>
    %63 = arith.addf %62, %61 : vector<2x128xf32>
    %64 = arith.divf %62, %63 : vector<2x128xf32>
    %65 = vector.extract_strided_slice %46 {offsets = [0, 256], sizes = [2, 128], strides = [1, 1]} : vector<2x384xf32> to vector<2x128xf32>
    %66 = vector.extract_strided_slice %48 {offsets = [0, 256], sizes = [2, 128], strides = [1, 1]} : vector<2x384xf32> to vector<2x128xf32>
    %67 = arith.addf %66, %6 : vector<2x128xf32>
    %68 = arith.mulf %56, %67 : vector<2x128xf32>
    %69 = arith.addf %65, %68 : vector<2x128xf32>
    %70 = math.tanh %69 : vector<2x128xf32>
    %71 = arith.subf %38, %70 : vector<2x128xf32>
    %72 = arith.mulf %64, %71 : vector<2x128xf32>
    %73 = arith.addf %70, %72 : vector<2x128xf32>
    %74 = arith.index_cast %c1_i32 : i32 to index
    %c0_18 = arith.constant 0 : index
    %c0_19 = arith.constant 0 : index
    %75 = vector.load %arg6[%74, %c0_18, %c0_19] : memref<8x2x128xf32, #tpu.memory_space<vmem>>, vector<1x2x128xf32>
    %76 = vector.shape_cast %75 : vector<1x2x128xf32> to vector<2x128xf32>
    %77 = vector.shape_cast %73 : vector<2x128xf32> to vector<1x2x128xf32>
    tpu.vector_store %arg6[%74, %c0_18, %c0_19], %77 {strides = array<i32>} : memref<8x2x128xf32, #tpu.memory_space<vmem>>, vector<1x2x128xf32>,
    %c2_i32 = arith.constant 2 : i32
    %78 = arith.index_cast %c2_i32 : i32 to index
    %c0_20 = arith.constant 0 : index
    %c0_21 = arith.constant 0 : index
    %79 = vector.load %arg2[%78, %c0_20, %c0_21] : memref<8x2x384xbf16, #tpu.memory_space<vmem>>, vector<1x2x384xbf16>
    %80 = vector.shape_cast %79 : vector<1x2x384xbf16> to vector<2x384xbf16>
    %81 = arith.extf %80 : vector<2x384xbf16> to vector<2x384xf32>
    %82 = arith.truncf %73 : vector<2x128xf32> to vector<2x128xbf16>
    %cst_22 = arith.constant dense<0.000000e+00> : vector<2x384xf32>
    %83 = tpu.matmul %82, %3, %cst_22 {dimension_numbers = #tpu.dot_dimension_numbers<[1], [0], [0], [1], [0, 0, 1, 1], [], []>} : vector<2x128xbf16>, vector<128x384xbf16>, vector<2x384xf32> -> vector<2x384xf32>
    %84 = vector.extract_strided_slice %81 {offsets = [0, 0], sizes = [2, 128], strides = [1, 1]} : vector<2x384xf32> to vector<2x128xf32>
    %85 = vector.extract_strided_slice %83 {offsets = [0, 0], sizes = [2, 128], strides = [1, 1]} : vector<2x384xf32> to vector<2x128xf32>
    %86 = arith.addf %84, %85 : vector<2x128xf32>
    %87 = arith.negf %86 : vector<2x128xf32>
    %88 = math.exp %87 : vector<2x128xf32>
    %cst_23 = arith.constant 1.000000e+00 : f32
    %89 = vector.broadcast %cst_23 : f32 to vector<2x128xf32>
    %90 = arith.addf %89, %88 : vector<2x128xf32>
    %91 = arith.divf %89, %90 : vector<2x128xf32>
    %92 = vector.extract_strided_slice %81 {offsets = [0, 128], sizes = [2, 128], strides = [1, 1]} : vector<2x384xf32> to vector<2x128xf32>
    %93 = vector.extract_strided_slice %83 {offsets = [0, 128], sizes = [2, 128], strides = [1, 1]} : vector<2x384xf32> to vector<2x128xf32>
    %94 = arith.addf %92, %93 : vector<2x128xf32>
    %95 = arith.negf %94 : vector<2x128xf32>
    %96 = math.exp %95 : vector<2x128xf32>
    %cst_24 = arith.constant 1.000000e+00 : f32
    %97 = vector.broadcast %cst_24 : f32 to vector<2x128xf32>
    %98 = arith.addf %97, %96 : vector<2x128xf32>
    %99 = arith.divf %97, %98 : vector<2x128xf32>
    %100 = vector.extract_strided_slice %81 {offsets = [0, 256], sizes = [2, 128], strides = [1, 1]} : vector<2x384xf32> to vector<2x128xf32>
    %101 = vector.extract_strided_slice %83 {offsets = [0, 256], sizes = [2, 128], strides = [1, 1]} : vector<2x384xf32> to vector<2x128xf32>
    %102 = arith.addf %101, %6 : vector<2x128xf32>
    %103 = arith.mulf %91, %102 : vector<2x128xf32>
    %104 = arith.addf %100, %103 : vector<2x128xf32>
    %105 = math.tanh %104 : vector<2x128xf32>
    %106 = arith.subf %73, %105 : vector<2x128xf32>
    %107 = arith.mulf %99, %106 : vector<2x128xf32>
    %108 = arith.addf %105, %107 : vector<2x128xf32>
    %109 = arith.index_cast %c2_i32 : i32 to index
    %c0_25 = arith.constant 0 : index
    %c0_26 = arith.constant 0 : index
    %110 = vector.load %arg6[%109, %c0_25, %c0_26] : memref<8x2x128xf32, #tpu.memory_space<vmem>>, vector<1x2x128xf32>
    %111 = vector.shape_cast %110 : vector<1x2x128xf32> to vector<2x128xf32>
    %112 = vector.shape_cast %108 : vector<2x128xf32> to vector<1x2x128xf32>
    tpu.vector_store %arg6[%109, %c0_25, %c0_26], %112 {strides = array<i32>} : memref<8x2x128xf32, #tpu.memory_space<vmem>>, vector<1x2x128xf32>,
    %c3_i32 = arith.constant 3 : i32
    %113 = arith.index_cast %c3_i32 : i32 to index
    %c0_27 = arith.constant 0 : index
    %c0_28 = arith.constant 0 : index
    %114 = vector.load %arg2[%113, %c0_27, %c0_28] : memref<8x2x384xbf16, #tpu.memory_space<vmem>>, vector<1x2x384xbf16>
    %115 = vector.shape_cast %114 : vector<1x2x384xbf16> to vector<2x384xbf16>
    %116 = arith.extf %115 : vector<2x384xbf16> to vector<2x384xf32>
    %117 = arith.truncf %108 : vector<2x128xf32> to vector<2x128xbf16>
    %cst_29 = arith.constant dense<0.000000e+00> : vector<2x384xf32>
    %118 = tpu.matmul %117, %3, %cst_29 {dimension_numbers = #tpu.dot_dimension_numbers<[1], [0], [0], [1], [0, 0, 1, 1], [], []>} : vector<2x128xbf16>, vector<128x384xbf16>, vector<2x384xf32> -> vector<2x384xf32>
    %119 = vector.extract_strided_slice %116 {offsets = [0, 0], sizes = [2, 128], strides = [1, 1]} : vector<2x384xf32> to vector<2x128xf32>
    %120 = vector.extract_strided_slice %118 {offsets = [0, 0], sizes = [2, 128], strides = [1, 1]} : vector<2x384xf32> to vector<2x128xf32>
    %121 = arith.addf %119, %120 : vector<2x128xf32>
    %122 = arith.negf %121 : vector<2x128xf32>
    %123 = math.exp %122 : vector<2x128xf32>
    %cst_30 = arith.constant 1.000000e+00 : f32
    %124 = vector.broadcast %cst_30 : f32 to vector<2x128xf32>
    %125 = arith.addf %124, %123 : vector<2x128xf32>
    %126 = arith.divf %124, %125 : vector<2x128xf32>
    %127 = vector.extract_strided_slice %116 {offsets = [0, 128], sizes = [2, 128], strides = [1, 1]} : vector<2x384xf32> to vector<2x128xf32>
    %128 = vector.extract_strided_slice %118 {offsets = [0, 128], sizes = [2, 128], strides = [1, 1]} : vector<2x384xf32> to vector<2x128xf32>
    %129 = arith.addf %127, %128 : vector<2x128xf32>
    %130 = arith.negf %129 : vector<2x128xf32>
    %131 = math.exp %130 : vector<2x128xf32>
    %cst_31 = arith.constant 1.000000e+00 : f32
    %132 = vector.broadcast %cst_31 : f32 to vector<2x128xf32>
    %133 = arith.addf %132, %131 : vector<2x128xf32>
    %134 = arith.divf %132, %133 : vector<2x128xf32>
    %135 = vector.extract_strided_slice %116 {offsets = [0, 256], sizes = [2, 128], strides = [1, 1]} : vector<2x384xf32> to vector<2x128xf32>
    %136 = vector.extract_strided_slice %118 {offsets = [0, 256], sizes = [2, 128], strides = [1, 1]} : vector<2x384xf32> to vector<2x128xf32>
    %137 = arith.addf %136, %6 : vector<2x128xf32>
    %138 = arith.mulf %126, %137 : vector<2x128xf32>
    %139 = arith.addf %135, %138 : vector<2x128xf32>
    %140 = math.tanh %139 : vector<2x128xf32>
    %141 = arith.subf %108, %140 : vector<2x128xf32>
    %142 = arith.mulf %134, %141 : vector<2x128xf32>
    %143 = arith.addf %140, %142 : vector<2x128xf32>
    %144 = arith.index_cast %c3_i32 : i32 to index
    %c0_32 = arith.constant 0 : index
    %c0_33 = arith.constant 0 : index
    %145 = vector.load %arg6[%144, %c0_32, %c0_33] : memref<8x2x128xf32, #tpu.memory_space<vmem>>, vector<1x2x128xf32>
    %146 = vector.shape_cast %145 : vector<1x2x128xf32> to vector<2x128xf32>
    %147 = vector.shape_cast %143 : vector<2x128xf32> to vector<1x2x128xf32>
    tpu.vector_store %arg6[%144, %c0_32, %c0_33], %147 {strides = array<i32>} : memref<8x2x128xf32, #tpu.memory_space<vmem>>, vector<1x2x128xf32>,
    %c4_i32 = arith.constant 4 : i32
    %148 = arith.index_cast %c4_i32 : i32 to index
    %c0_34 = arith.constant 0 : index
    %c0_35 = arith.constant 0 : index
    %149 = vector.load %arg2[%148, %c0_34, %c0_35] : memref<8x2x384xbf16, #tpu.memory_space<vmem>>, vector<1x2x384xbf16>
    %150 = vector.shape_cast %149 : vector<1x2x384xbf16> to vector<2x384xbf16>
    %151 = arith.extf %150 : vector<2x384xbf16> to vector<2x384xf32>
    %152 = arith.truncf %143 : vector<2x128xf32> to vector<2x128xbf16>
    %cst_36 = arith.constant dense<0.000000e+00> : vector<2x384xf32>
    %153 = tpu.matmul %152, %3, %cst_36 {dimension_numbers = #tpu.dot_dimension_numbers<[1], [0], [0], [1], [0, 0, 1, 1], [], []>} : vector<2x128xbf16>, vector<128x384xbf16>, vector<2x384xf32> -> vector<2x384xf32>
    %154 = vector.extract_strided_slice %151 {offsets = [0, 0], sizes = [2, 128], strides = [1, 1]} : vector<2x384xf32> to vector<2x128xf32>
    %155 = vector.extract_strided_slice %153 {offsets = [0, 0], sizes = [2, 128], strides = [1, 1]} : vector<2x384xf32> to vector<2x128xf32>
    %156 = arith.addf %154, %155 : vector<2x128xf32>
    %157 = arith.negf %156 : vector<2x128xf32>
    %158 = math.exp %157 : vector<2x128xf32>
    %cst_37 = arith.constant 1.000000e+00 : f32
    %159 = vector.broadcast %cst_37 : f32 to vector<2x128xf32>
    %160 = arith.addf %159, %158 : vector<2x128xf32>
    %161 = arith.divf %159, %160 : vector<2x128xf32>
    %162 = vector.extract_strided_slice %151 {offsets = [0, 128], sizes = [2, 128], strides = [1, 1]} : vector<2x384xf32> to vector<2x128xf32>
    %163 = vector.extract_strided_slice %153 {offsets = [0, 128], sizes = [2, 128], strides = [1, 1]} : vector<2x384xf32> to vector<2x128xf32>
    %164 = arith.addf %162, %163 : vector<2x128xf32>
    %165 = arith.negf %164 : vector<2x128xf32>
    %166 = math.exp %165 : vector<2x128xf32>
    %cst_38 = arith.constant 1.000000e+00 : f32
    %167 = vector.broadcast %cst_38 : f32 to vector<2x128xf32>
    %168 = arith.addf %167, %166 : vector<2x128xf32>
    %169 = arith.divf %167, %168 : vector<2x128xf32>
    %170 = vector.extract_strided_slice %151 {offsets = [0, 256], sizes = [2, 128], strides = [1, 1]} : vector<2x384xf32> to vector<2x128xf32>
    %171 = vector.extract_strided_slice %153 {offsets = [0, 256], sizes = [2, 128], strides = [1, 1]} : vector<2x384xf32> to vector<2x128xf32>
    %172 = arith.addf %171, %6 : vector<2x128xf32>
    %173 = arith.mulf %161, %172 : vector<2x128xf32>
    %174 = arith.addf %170, %173 : vector<2x128xf32>
    %175 = math.tanh %174 : vector<2x128xf32>
    %176 = arith.subf %143, %175 : vector<2x128xf32>
    %177 = arith.mulf %169, %176 : vector<2x128xf32>
    %178 = arith.addf %175, %177 : vector<2x128xf32>
    %179 = arith.index_cast %c4_i32 : i32 to index
    %c0_39 = arith.constant 0 : index
    %c0_40 = arith.constant 0 : index
    %180 = vector.load %arg6[%179, %c0_39, %c0_40] : memref<8x2x128xf32, #tpu.memory_space<vmem>>, vector<1x2x128xf32>
    %181 = vector.shape_cast %180 : vector<1x2x128xf32> to vector<2x128xf32>
    %182 = vector.shape_cast %178 : vector<2x128xf32> to vector<1x2x128xf32>
    tpu.vector_store %arg6[%179, %c0_39, %c0_40], %182 {strides = array<i32>} : memref<8x2x128xf32, #tpu.memory_space<vmem>>, vector<1x2x128xf32>,
    %c5_i32 = arith.constant 5 : i32
    %183 = arith.index_cast %c5_i32 : i32 to index
    %c0_41 = arith.constant 0 : index
    %c0_42 = arith.constant 0 : index
    %184 = vector.load %arg2[%183, %c0_41, %c0_42] : memref<8x2x384xbf16, #tpu.memory_space<vmem>>, vector<1x2x384xbf16>
    %185 = vector.shape_cast %184 : vector<1x2x384xbf16> to vector<2x384xbf16>
    %186 = arith.extf %185 : vector<2x384xbf16> to vector<2x384xf32>
    %187 = arith.truncf %178 : vector<2x128xf32> to vector<2x128xbf16>
    %cst_43 = arith.constant dense<0.000000e+00> : vector<2x384xf32>
    %188 = tpu.matmul %187, %3, %cst_43 {dimension_numbers = #tpu.dot_dimension_numbers<[1], [0], [0], [1], [0, 0, 1, 1], [], []>} : vector<2x128xbf16>, vector<128x384xbf16>, vector<2x384xf32> -> vector<2x384xf32>
    %189 = vector.extract_strided_slice %186 {offsets = [0, 0], sizes = [2, 128], strides = [1, 1]} : vector<2x384xf32> to vector<2x128xf32>
    %190 = vector.extract_strided_slice %188 {offsets = [0, 0], sizes = [2, 128], strides = [1, 1]} : vector<2x384xf32> to vector<2x128xf32>
    %191 = arith.addf %189, %190 : vector<2x128xf32>
    %192 = arith.negf %191 : vector<2x128xf32>
    %193 = math.exp %192 : vector<2x128xf32>
    %cst_44 = arith.constant 1.000000e+00 : f32
    %194 = vector.broadcast %cst_44 : f32 to vector<2x128xf32>
    %195 = arith.addf %194, %193 : vector<2x128xf32>
    %196 = arith.divf %194, %195 : vector<2x128xf32>
    %197 = vector.extract_strided_slice %186 {offsets = [0, 128], sizes = [2, 128], strides = [1, 1]} : vector<2x384xf32> to vector<2x128xf32>
    %198 = vector.extract_strided_slice %188 {offsets = [0, 128], sizes = [2, 128], strides = [1, 1]} : vector<2x384xf32> to vector<2x128xf32>
    %199 = arith.addf %197, %198 : vector<2x128xf32>
    %200 = arith.negf %199 : vector<2x128xf32>
    %201 = math.exp %200 : vector<2x128xf32>
    %cst_45 = arith.constant 1.000000e+00 : f32
    %202 = vector.broadcast %cst_45 : f32 to vector<2x128xf32>
    %203 = arith.addf %202, %201 : vector<2x128xf32>
    %204 = arith.divf %202, %203 : vector<2x128xf32>
    %205 = vector.extract_strided_slice %186 {offsets = [0, 256], sizes = [2, 128], strides = [1, 1]} : vector<2x384xf32> to vector<2x128xf32>
    %206 = vector.extract_strided_slice %188 {offsets = [0, 256], sizes = [2, 128], strides = [1, 1]} : vector<2x384xf32> to vector<2x128xf32>
    %207 = arith.addf %206, %6 : vector<2x128xf32>
    %208 = arith.mulf %196, %207 : vector<2x128xf32>
    %209 = arith.addf %205, %208 : vector<2x128xf32>
    %210 = math.tanh %209 : vector<2x128xf32>
    %211 = arith.subf %178, %210 : vector<2x128xf32>
    %212 = arith.mulf %204, %211 : vector<2x128xf32>
    %213 = arith.addf %210, %212 : vector<2x128xf32>
    %214 = arith.index_cast %c5_i32 : i32 to index
    %c0_46 = arith.constant 0 : index
    %c0_47 = arith.constant 0 : index
    %215 = vector.load %arg6[%214, %c0_46, %c0_47] : memref<8x2x128xf32, #tpu.memory_space<vmem>>, vector<1x2x128xf32>
    %216 = vector.shape_cast %215 : vector<1x2x128xf32> to vector<2x128xf32>
    %217 = vector.shape_cast %213 : vector<2x128xf32> to vector<1x2x128xf32>
    tpu.vector_store %arg6[%214, %c0_46, %c0_47], %217 {strides = array<i32>} : memref<8x2x128xf32, #tpu.memory_space<vmem>>, vector<1x2x128xf32>,
    %c6_i32 = arith.constant 6 : i32
    %218 = arith.index_cast %c6_i32 : i32 to index
    %c0_48 = arith.constant 0 : index
    %c0_49 = arith.constant 0 : index
    %219 = vector.load %arg2[%218, %c0_48, %c0_49] : memref<8x2x384xbf16, #tpu.memory_space<vmem>>, vector<1x2x384xbf16>
    %220 = vector.shape_cast %219 : vector<1x2x384xbf16> to vector<2x384xbf16>
    %221 = arith.extf %220 : vector<2x384xbf16> to vector<2x384xf32>
    %222 = arith.truncf %213 : vector<2x128xf32> to vector<2x128xbf16>
    %cst_50 = arith.constant dense<0.000000e+00> : vector<2x384xf32>
    %223 = tpu.matmul %222, %3, %cst_50 {dimension_numbers = #tpu.dot_dimension_numbers<[1], [0], [0], [1], [0, 0, 1, 1], [], []>} : vector<2x128xbf16>, vector<128x384xbf16>, vector<2x384xf32> -> vector<2x384xf32>
    %224 = vector.extract_strided_slice %221 {offsets = [0, 0], sizes = [2, 128], strides = [1, 1]} : vector<2x384xf32> to vector<2x128xf32>
    %225 = vector.extract_strided_slice %223 {offsets = [0, 0], sizes = [2, 128], strides = [1, 1]} : vector<2x384xf32> to vector<2x128xf32>
    %226 = arith.addf %224, %225 : vector<2x128xf32>
    %227 = arith.negf %226 : vector<2x128xf32>
    %228 = math.exp %227 : vector<2x128xf32>
    %cst_51 = arith.constant 1.000000e+00 : f32
    %229 = vector.broadcast %cst_51 : f32 to vector<2x128xf32>
    %230 = arith.addf %229, %228 : vector<2x128xf32>
    %231 = arith.divf %229, %230 : vector<2x128xf32>
    %232 = vector.extract_strided_slice %221 {offsets = [0, 128], sizes = [2, 128], strides = [1, 1]} : vector<2x384xf32> to vector<2x128xf32>
    %233 = vector.extract_strided_slice %223 {offsets = [0, 128], sizes = [2, 128], strides = [1, 1]} : vector<2x384xf32> to vector<2x128xf32>
    %234 = arith.addf %232, %233 : vector<2x128xf32>
    %235 = arith.negf %234 : vector<2x128xf32>
    %236 = math.exp %235 : vector<2x128xf32>
    %cst_52 = arith.constant 1.000000e+00 : f32
    %237 = vector.broadcast %cst_52 : f32 to vector<2x128xf32>
    %238 = arith.addf %237, %236 : vector<2x128xf32>
    %239 = arith.divf %237, %238 : vector<2x128xf32>
    %240 = vector.extract_strided_slice %221 {offsets = [0, 256], sizes = [2, 128], strides = [1, 1]} : vector<2x384xf32> to vector<2x128xf32>
    %241 = vector.extract_strided_slice %223 {offsets = [0, 256], sizes = [2, 128], strides = [1, 1]} : vector<2x384xf32> to vector<2x128xf32>
    %242 = arith.addf %241, %6 : vector<2x128xf32>
    %243 = arith.mulf %231, %242 : vector<2x128xf32>
    %244 = arith.addf %240, %243 : vector<2x128xf32>
    %245 = math.tanh %244 : vector<2x128xf32>
    %246 = arith.subf %213, %245 : vector<2x128xf32>
    %247 = arith.mulf %239, %246 : vector<2x128xf32>
    %248 = arith.addf %245, %247 : vector<2x128xf32>
    %249 = arith.index_cast %c6_i32 : i32 to index
    %c0_53 = arith.constant 0 : index
    %c0_54 = arith.constant 0 : index
    %250 = vector.load %arg6[%249, %c0_53, %c0_54] : memref<8x2x128xf32, #tpu.memory_space<vmem>>, vector<1x2x128xf32>
    %251 = vector.shape_cast %250 : vector<1x2x128xf32> to vector<2x128xf32>
    %252 = vector.shape_cast %248 : vector<2x128xf32> to vector<1x2x128xf32>
    tpu.vector_store %arg6[%249, %c0_53, %c0_54], %252 {strides = array<i32>} : memref<8x2x128xf32, #tpu.memory_space<vmem>>, vector<1x2x128xf32>,
    %c7_i32 = arith.constant 7 : i32
    %253 = arith.index_cast %c7_i32 : i32 to index
    %c0_55 = arith.constant 0 : index
    %c0_56 = arith.constant 0 : index
    %254 = vector.load %arg2[%253, %c0_55, %c0_56] : memref<8x2x384xbf16, #tpu.memory_space<vmem>>, vector<1x2x384xbf16>
    %255 = vector.shape_cast %254 : vector<1x2x384xbf16> to vector<2x384xbf16>
    %256 = arith.extf %255 : vector<2x384xbf16> to vector<2x384xf32>
    %257 = arith.truncf %248 : vector<2x128xf32> to vector<2x128xbf16>
    %cst_57 = arith.constant dense<0.000000e+00> : vector<2x384xf32>
    %258 = tpu.matmul %257, %3, %cst_57 {dimension_numbers = #tpu.dot_dimension_numbers<[1], [0], [0], [1], [0, 0, 1, 1], [], []>} : vector<2x128xbf16>, vector<128x384xbf16>, vector<2x384xf32> -> vector<2x384xf32>
    %259 = vector.extract_strided_slice %256 {offsets = [0, 0], sizes = [2, 128], strides = [1, 1]} : vector<2x384xf32> to vector<2x128xf32>
    %260 = vector.extract_strided_slice %258 {offsets = [0, 0], sizes = [2, 128], strides = [1, 1]} : vector<2x384xf32> to vector<2x128xf32>
    %261 = arith.addf %259, %260 : vector<2x128xf32>
    %262 = arith.negf %261 : vector<2x128xf32>
    %263 = math.exp %262 : vector<2x128xf32>
    %cst_58 = arith.constant 1.000000e+00 : f32
    %264 = vector.broadcast %cst_58 : f32 to vector<2x128xf32>
    %265 = arith.addf %264, %263 : vector<2x128xf32>
    %266 = arith.divf %264, %265 : vector<2x128xf32>
    %267 = vector.extract_strided_slice %256 {offsets = [0, 128], sizes = [2, 128], strides = [1, 1]} : vector<2x384xf32> to vector<2x128xf32>
    %268 = vector.extract_strided_slice %258 {offsets = [0, 128], sizes = [2, 128], strides = [1, 1]} : vector<2x384xf32> to vector<2x128xf32>
    %269 = arith.addf %267, %268 : vector<2x128xf32>
    %270 = arith.negf %269 : vector<2x128xf32>
    %271 = math.exp %270 : vector<2x128xf32>
    %cst_59 = arith.constant 1.000000e+00 : f32
    %272 = vector.broadcast %cst_59 : f32 to vector<2x128xf32>
    %273 = arith.addf %272, %271 : vector<2x128xf32>
    %274 = arith.divf %272, %273 : vector<2x128xf32>
    %275 = vector.extract_strided_slice %256 {offsets = [0, 256], sizes = [2, 128], strides = [1, 1]} : vector<2x384xf32> to vector<2x128xf32>
    %276 = vector.extract_strided_slice %258 {offsets = [0, 256], sizes = [2, 128], strides = [1, 1]} : vector<2x384xf32> to vector<2x128xf32>
    %277 = arith.addf %276, %6 : vector<2x128xf32>
    %278 = arith.mulf %266, %277 : vector<2x128xf32>
    %279 = arith.addf %275, %278 : vector<2x128xf32>
    %280 = math.tanh %279 : vector<2x128xf32>
    %281 = arith.subf %248, %280 : vector<2x128xf32>
    %282 = arith.mulf %274, %281 : vector<2x128xf32>
    %283 = arith.addf %280, %282 : vector<2x128xf32>
    %284 = arith.index_cast %c7_i32 : i32 to index
    %c0_60 = arith.constant 0 : index
    %c0_61 = arith.constant 0 : index
    %285 = vector.load %arg6[%284, %c0_60, %c0_61] : memref<8x2x128xf32, #tpu.memory_space<vmem>>, vector<1x2x128xf32>
    %286 = vector.shape_cast %285 : vector<1x2x128xf32> to vector<2x128xf32>
    %287 = vector.shape_cast %283 : vector<2x128xf32> to vector<1x2x128xf32>
    tpu.vector_store %arg6[%284, %c0_60, %c0_61], %287 {strides = array<i32>} : memref<8x2x128xf32, #tpu.memory_space<vmem>>, vector<1x2x128xf32>,
    %c8_i32 = arith.constant 8 : i32
    %c0_62 = arith.constant 0 : index
    %c0_63 = arith.constant 0 : index
    %288 = vector.load %arg7[%c0_62, %c0_63] : memref<2x128xf32, #tpu.memory_space<vmem>>, vector<2x128xf32>
    tpu.vector_store %arg7[%c0_62, %c0_63], %283 {strides = array<i32>} : memref<2x128xf32, #tpu.memory_space<vmem>>, vector<2x128xf32>,
    return
  }
  func.func @transform_0(%arg0: i32, %arg1: i32) -> (i32, i32, i32) {
    %c0_i32 = arith.constant 0 : i32
    %c0_i32_0 = arith.constant 0 : i32
    return %arg1, %arg0, %c0_i32 : i32, i32, i32
  }
  func.func @transform_1(%arg0: i32, %arg1: i32) -> (i32, i32) {
    %c0_i32 = arith.constant 0 : i32
    %c0_i32_0 = arith.constant 0 : i32
    return %arg0, %c0_i32 : i32, i32
  }
  func.func @transform_2(%arg0: i32, %arg1: i32) -> (i32, i32) {
    %c0_i32 = arith.constant 0 : i32
    %c0_i32_0 = arith.constant 0 : i32
    %c0_i32_1 = arith.constant 0 : i32
    return %c0_i32, %c0_i32_0 : i32, i32
  }
  func.func @transform_3(%arg0: i32, %arg1: i32) -> (i32, i32) {
    %c0_i32 = arith.constant 0 : i32
    %c0_i32_0 = arith.constant 0 : i32
    %c0_i32_1 = arith.constant 0 : i32
    return %c0_i32, %c0_i32_0 : i32, i32
  }
  func.func @transform_4(%arg0: i32, %arg1: i32) -> (i32, i32, i32) {
    %c0_i32 = arith.constant 0 : i32
    %c0_i32_0 = arith.constant 0 : i32
    return %arg1, %arg0, %c0_i32 : i32, i32, i32
  }
}

</mosaic_0001>

<llo_original>
// kernel: tpu_custom_call.1
$region0: #{tpu_custom_call.1}
  #allocation0 [shape = 'u32[]', space=smem, size = 0x4, offset = 0x4, fixed_abs, tag = 'smem constant byte address 0x4 - core index']
  #allocation1 [shape = 'u32[144,128]{1,0:T(1,128)}', space=vmem, size = 0x12000, scoped, tag = 'internal scratch']
  #allocation2 [shape = 'f32[2,128]{1,0:T(2,128)}', space=vmem, size = 0x400, scoped, tag = 'scratch operand']
  %s0 = inlined_call_operand.hbm [shape: bf16[8,2,384], index: 0, kind: input, shape index: {}]
  %s1 = inlined_call_operand.vmem [shape: f32[2,128], index: 1, kind: input, shape index: {}]
  %s2 = inlined_call_operand.hbm [shape: bf16[128,384], index: 2, kind: input, shape index: {}]
  %s3 = inlined_call_operand.vmem [shape: f32[1,128], index: 3, kind: input, shape index: {}]
  %s4 = inlined_call_operand.hbm [shape: f32[8,2,128], index: 4, kind: output, shape index: {}]
  %s5 = sld [smem:[#allocation0]]
  $region38: #{tpu_custom_call.1} parent=0
    _
  %s7 = ssub.s32 1, %s5
  %s8 = scalar_select 0, %s7, %s5
  $region1: #{tpu_custom_call.1} parent=0
    #allocation3 [shape = 'u8[12288]{0}', space=vmem, size = 0x3000, scoped, tag = 'input window, operand 0, single buffered']
    #allocation4 [shape = 's32[1]{0}', space=sflag, size = 0x4, scoped, tag = 'scoped memory for tpu_custom_call.1']
    #allocation5 [shape = 's32[1]{0}', space=sflag, size = 0x4, scoped, tag = 'scoped memory for tpu_custom_call.1']
    #allocation6 [shape = 'u8[98304]{0}', space=vmem, size = 0x18000, scoped, tag = 'input window, operand 2, single buffered']
    #allocation7 [shape = 's32[1]{0}', space=sflag, size = 0x4, scoped, tag = 'scoped memory for tpu_custom_call.1']
    #allocation8 [shape = 'u8[8192]{0}', space=vmem, size = 0x2000, scoped, tag = 'output window, operand 0, single buffered']
    %9 = vsyncpa [#allocation4], 0
    %10 = vsyncpa [#allocation7], 0
    %11 = vsyncpa [#allocation5], 0
    // Predicated region
    $region2: #{tpu_custom_call.1} parent=1 // pred_check
      _
    $region3: #{tpu_custom_call.1} parent=1 // pred_check_branch
      %13 = sbr.rel (0) target = $region5
    $region4: #{tpu_custom_call.1} parent=1 // pred_region
      %s15 = ssub.s32 384, 384
      %16 = vsyncadd [#allocation4], %s15
      %s17 = sshll.u32 [#allocation3], 4
      %s18 = int_to_ptr.vmem [resolvable:$true] %s17
      %23 = dma.hbm_to_vmem [thread:$0]  %s0, 384, %s18, [#allocation4], 48, 48, 3
    $region5: #{tpu_custom_call.1} parent=1 // pred_fallthru
      _
    // Predicated region
    $region6: #{tpu_custom_call.1} parent=1 // pred_check
      _
    $region7: #{tpu_custom_call.1} parent=1 // pred_check_branch
      %25 = sbr.rel (0) target = $region9
    $region8: #{tpu_custom_call.1} parent=1 // pred_region
      _
    $region9: #{tpu_custom_call.1} parent=1 // pred_fallthru
      _
    // Predicated region
    $region10: #{tpu_custom_call.1} parent=1 // pred_check
      _
    $region11: #{tpu_custom_call.1} parent=1 // pred_check_branch
      %27 = sbr.rel (0) target = $region13
    $region12: #{tpu_custom_call.1} parent=1 // pred_region
      %s29 = ssub.s32 3072, 3072
      %30 = vsyncadd [#allocation7], %s29
      %s31 = sshll.u32 [#allocation6], 4
      %s32 = int_to_ptr.vmem [resolvable:$true] %s31
      %37 = dma.hbm_to_vmem [thread:$0]  %s2, 3072, %s32, [#allocation7], 192, 192, 12
    $region13: #{tpu_custom_call.1} parent=1 // pred_fallthru
      _
    // Predicated region
    $region14: #{tpu_custom_call.1} parent=1 // pred_check
      _
    $region15: #{tpu_custom_call.1} parent=1 // pred_check_branch
      %39 = sbr.rel (0) target = $region17
    $region16: #{tpu_custom_call.1} parent=1 // pred_region
      _
    $region17: #{tpu_custom_call.1} parent=1 // pred_fallthru
      _
    // Predicated region
    $region18: #{tpu_custom_call.1} parent=1 // pred_check
      _
    $region19: #{tpu_custom_call.1} parent=1 // pred_check_branch
      %41 = sbr.rel (0) target = $region21
    $region20: #{tpu_custom_call.1} parent=1 // pred_region
      %42 = dma.done [#allocation4], 384
    $region21: #{tpu_custom_call.1} parent=1 // pred_fallthru
      _
    // Predicated region
    $region22: #{tpu_custom_call.1} parent=1 // pred_check
      _
    $region23: #{tpu_custom_call.1} parent=1 // pred_check_branch
      %44 = sbr.rel (0) target = $region25
    $region24: #{tpu_custom_call.1} parent=1 // pred_region
      %45 = dma.done [#allocation7], 3072
    $region25: #{tpu_custom_call.1} parent=1 // pred_fallthru
      _
    %p47 = scmp.eq.s32.totalorder 0, 0
    // Predicated region
    $region26: #{tpu_custom_call.1} parent=1 // pred_check
      %p48 = pneg %p47
    $region27: #{tpu_custom_call.1} parent=1 // pred_check_branch
      %50 = sbr.rel (%p48) target = $region29
    $region28: #{tpu_custom_call.1} parent=1 // pred_region
      %v51 = vld [vmem:[%s1] sm:$0x3]
      %52 = vst [vmem:[#allocation2] sm:$0x3] %v51
    $region29: #{tpu_custom_call.1} parent=1 // pred_fallthru
      _
    %v53 = vld [vmem:[#allocation6] sm:$0xff]
    %v54 = vld [vmem:[#allocation6 + $0x8] sm:$0xf]
    %v55 = vld [vmem:[#allocation6 + $0xc] sm:$0xff]
    %v56 = vld [vmem:[#allocation6 + $0x14] sm:$0xf]
    %v57 = vld [vmem:[#allocation6 + $0x18] sm:$0xff]
    %v58 = vld [vmem:[#allocation6 + $0x20] sm:$0xf]
    %v59 = vld [vmem:[#allocation6 + $0x24] sm:$0xff]
    %v60 = vld [vmem:[#allocation6 + $0x2c] sm:$0xf]
    %v61 = vld [vmem:[#allocation6 + $0x30] sm:$0xff]
    %v62 = vld [vmem:[#allocation6 + $0x38] sm:$0xf]
    %v63 = vld [vmem:[#allocation6 + $0x3c] sm:$0xff]
    %v64 = vld [vmem:[#allocation6 + $0x44] sm:$0xf]
    %v65 = vld [vmem:[#allocation6 + $0x48] sm:$0xff]
    %v66 = vld [vmem:[#allocation6 + $0x50] sm:$0xf]
    %v67 = vld [vmem:[#allocation6 + $0x54] sm:$0xff]
    %v68 = vld [vmem:[#allocation6 + $0x5c] sm:$0xf]
    %v69 = vld [vmem:[#allocation6 + $0x60] sm:$0xff]
    %v70 = vld [vmem:[#allocation6 + $0x68] sm:$0xf]
    %v71 = vld [vmem:[#allocation6 + $0x6c] sm:$0xff]
    %v72 = vld [vmem:[#allocation6 + $0x74] sm:$0xf]
    %v73 = vld [vmem:[#allocation6 + $0x78] sm:$0xff]
    %v74 = vld [vmem:[#allocation6 + $0x80] sm:$0xf]
    %v75 = vld [vmem:[#allocation6 + $0x84] sm:$0xff]
    %v76 = vld [vmem:[#allocation6 + $0x8c] sm:$0xf]
    %v77 = vld [vmem:[#allocation6 + $0x90] sm:$0xff]
    %v78 = vld [vmem:[#allocation6 + $0x98] sm:$0xf]
    %v79 = vld [vmem:[#allocation6 + $0x9c] sm:$0xff]
    %v80 = vld [vmem:[#allocation6 + $0xa4] sm:$0xf]
    %v81 = vld [vmem:[#allocation6 + $0xa8] sm:$0xff]
    %v82 = vld [vmem:[#allocation6 + $0xb0] sm:$0xf]
    %v83 = vld [vmem:[#allocation6 + $0xb4] sm:$0xff]
    %v84 = vld [vmem:[#allocation6 + $0xbc] sm:$0xf]
    %v85 = vld [vmem:[%s3] sm:$0x1]
    %v87 = vlaneseq
    %v88 = vshrl.u32 %v87, 7
    %v89 = vsub.s32 0, %v88
    %v90 = vrot.slane %v85, %v89
    %v92 = vld [vmem:[#allocation2] sm:$0x3]
    %v93 = vld [vmem:[#allocation3] sm:$0x7]
    %v94 = vunpack.c.l.bf16 %v93
    %v95 = vpack.c.bf16 %v92, %v92
    %v128 = vunpack.c.l.b16 %v53
    %v129 = vunpack.c.h.b16 %v53
    %v130 = vunpack.c.l.b16 %v54
    %v131 = vunpack.c.l.b16 %v55
    %v132 = vunpack.c.h.b16 %v55
    %v133 = vunpack.c.l.b16 %v56
    %v134 = vunpack.c.l.b16 %v57
    %v135 = vunpack.c.h.b16 %v57
    %v136 = vunpack.c.l.b16 %v58
    %v137 = vunpack.c.l.b16 %v59
    %v138 = vunpack.c.h.b16 %v59
    %v139 = vunpack.c.l.b16 %v60
    %v140 = vunpack.c.l.b16 %v61
    %v141 = vunpack.c.h.b16 %v61
    %v142 = vunpack.c.l.b16 %v62
    %v143 = vunpack.c.l.b16 %v63
    %v144 = vunpack.c.h.b16 %v63
    %v145 = vunpack.c.l.b16 %v64
    %v146 = vunpack.c.l.b16 %v65
    %v147 = vunpack.c.h.b16 %v65
    %v148 = vunpack.c.l.b16 %v66
    %v149 = vunpack.c.l.b16 %v67
    %v150 = vunpack.c.h.b16 %v67
    %v151 = vunpack.c.l.b16 %v68
    %v152 = vunpack.c.l.b16 %v69
    %v153 = vunpack.c.h.b16 %v69
    %v154 = vunpack.c.l.b16 %v70
    %v155 = vunpack.c.l.b16 %v71
    %v156 = vunpack.c.h.b16 %v71
    %v157 = vunpack.c.l.b16 %v72
    %v158 = vunpack.c.l.b16 %v73
    %v159 = vunpack.c.h.b16 %v73
    %v160 = vunpack.c.l.b16 %v74
    %v161 = vunpack.c.l.b16 %v75
    %v162 = vunpack.c.h.b16 %v75
    %v163 = vunpack.c.l.b16 %v76
    %v164 = vunpack.c.l.b16 %v77
    %v165 = vunpack.c.h.b16 %v77
    %v166 = vunpack.c.l.b16 %v78
    %v167 = vunpack.c.l.b16 %v79
    %v168 = vunpack.c.h.b16 %v79
    %v169 = vunpack.c.l.b16 %v80
    %v170 = vunpack.c.l.b16 %v81
    %v171 = vunpack.c.h.b16 %v81
    %v172 = vunpack.c.l.b16 %v82
    %v173 = vunpack.c.l.b16 %v83
    %v174 = vunpack.c.h.b16 %v83
    %v175 = vunpack.c.l.b16 %v84
    %v176 = vpack.c.b16 %v131, %v128
    %v177 = vpack.c.b16 %v132, %v129
    %v178 = vpack.c.b16 %v133, %v130
    %v179 = vpack.c.b16 %v137, %v134
    %v180 = vpack.c.b16 %v138, %v135
    %v181 = vpack.c.b16 %v139, %v136
    %v182 = vpack.c.b16 %v143, %v140
    %v183 = vpack.c.b16 %v144, %v141
    %v184 = vpack.c.b16 %v145, %v142
    %v185 = vpack.c.b16 %v149, %v146
    %v186 = vpack.c.b16 %v150, %v147
    %v187 = vpack.c.b16 %v151, %v148
    %v188 = vpack.c.b16 %v155, %v152
    %v189 = vpack.c.b16 %v156, %v153
    %v190 = vpack.c.b16 %v157, %v154
    %v191 = vpack.c.b16 %v161, %v158
    %v192 = vpack.c.b16 %v162, %v159
    %v193 = vpack.c.b16 %v163, %v160
    %v194 = vpack.c.b16 %v167, %v164
    %v195 = vpack.c.b16 %v168, %v165
    %v196 = vpack.c.b16 %v169, %v166
    %v197 = vpack.c.b16 %v173, %v170
    %v198 = vpack.c.b16 %v174, %v171
    %v199 = vpack.c.b16 %v175, %v172
    %224 = vmatprep.subr.bf16.mxu0 %v177
    %225 = vmatpush1.bf16.msra.mxu0 %v176
    %226 = vmatprep.subr.bf16.mxu0 %v180
    %227 = vmatpush1.bf16.msra.mxu0 %v179
    %228 = vmatprep.subr.bf16.mxu0 %v183
    %229 = vmatpush1.bf16.msra.mxu0 %v182
    %230 = vmatprep.subr.bf16.mxu0 %v186
    %231 = vmatpush1.bf16.msra.mxu0 %v185
    %232 = vmatprep.subr.bf16.mxu0 %v189
    %233 = vmatpush1.bf16.msra.mxu0 %v188
    %234 = vmatprep.subr.bf16.mxu0 %v192
    %235 = vmatpush1.bf16.msra.mxu0 %v191
    %236 = vmatprep.subr.bf16.mxu0 %v195
    %237 = vmatpush1.bf16.msra.mxu0 %v194
    %238 = vmatprep.subr.bf16.mxu0 %v198
    %239 = vmatpush1.bf16.msra.mxu0 %v197
    %240 = vmatprep.subr.bf16.mxu0 0
    %241 = vmatpush1.bf16.msra.mxu0 0
    %242 = vmatprep.subr.bf16.mxu0 0
    %243 = vmatpush1.bf16.msra.mxu0 0
    %244 = vmatprep.subr.bf16.mxu0 0
    %245 = vmatpush1.bf16.msra.mxu0 0
    %246 = vmatprep.subr.bf16.mxu0 0
    %247 = vmatpush1.bf16.msra.mxu0 0
    %248 = vmatprep.subr.bf16.mxu0 0
    %249 = vmatpush1.bf16.msra.mxu0 0
    %250 = vmatprep.subr.bf16.mxu0 0
    %251 = vmatpush1.bf16.msra.mxu0 0
    %252 = vmatprep.subr.bf16.mxu0 0
    %253 = vmatpush1.bf16.msra.mxu0 0
    %254 = vmatprep.subr.bf16.mxu0 0
    %255 = vmatpush1.bf16.msra.mxu0 0
    %256 = vmatprep.mubr.bf16.mxu0 0
    %257 = vmatmul.mubr.bf16.gmra.mrb[0].mxu0 %v95
    %v258 = vpop.f32.mrb[0].mxu0
    %v259 = vadd.f32 0.0, %v258
    %v260 = vpop.f32.mrb[0].mxu0
    %v261 = vadd.f32 0.0, %v260
    %v262 = vpop.f32.mrb[0].mxu0
    %v263 = vpop.f32.mrb[0].mxu0
    %264 = vdwg.mxu0
    %265 = vmatprep.subr.bf16.mxu0 0
    %266 = vmatpush1.bf16.msra.mxu0 %v178
    %267 = vmatprep.subr.bf16.mxu0 0
    %268 = vmatpush1.bf16.msra.mxu0 %v181
    %269 = vmatprep.subr.bf16.mxu0 0
    %270 = vmatpush1.bf16.msra.mxu0 %v184
    %271 = vmatprep.subr.bf16.mxu0 0
    %272 = vmatpush1.bf16.msra.mxu0 %v187
    %273 = vmatprep.subr.bf16.mxu0 0
    %274 = vmatpush1.bf16.msra.mxu0 %v190
    %275 = vmatprep.subr.bf16.mxu0 0
    %276 = vmatpush1.bf16.msra.mxu0 %v193
    %277 = vmatprep.subr.bf16.mxu0 0
    %278 = vmatpush1.bf16.msra.mxu0 %v196
    %279 = vmatprep.subr.bf16.mxu0 0
    %280 = vmatpush1.bf16.msra.mxu0 %v199
    %281 = vmatprep.subr.bf16.mxu0 0
    %282 = vmatpush1.bf16.msra.mxu0 0
    %283 = vmatprep.subr.bf16.mxu0 0
    %284 = vmatpush1.bf16.msra.mxu0 0
    %285 = vmatprep.subr.bf16.mxu0 0
    %286 = vmatpush1.bf16.msra.mxu0 0
    %287 = vmatprep.subr.bf16.mxu0 0
    %288 = vmatpush1.bf16.msra.mxu0 0
    %289 = vmatprep.subr.bf16.mxu0 0
    %290 = vmatpush1.bf16.msra.mxu0 0
    %291 = vmatprep.subr.bf16.mxu0 0
    %292 = vmatpush1.bf16.msra.mxu0 0
    %293 = vmatprep.subr.bf16.mxu0 0
    %294 = vmatpush1.bf16.msra.mxu0 0
    %295 = vmatprep.subr.bf16.mxu0 0
    %296 = vmatpush1.bf16.msra.mxu0 0
    %297 = vmatprep.mubr.bf16.mxu0 0
    %298 = vmatmul.mubr.bf16.gmra.mrb[0].mxu0 %v95
    %v299 = vpop.f32.mrb[0].mxu0
    %v300 = vadd.f32 0.0, %v299
    %v301 = vpop.f32.mrb[0].mxu0
    %v302 = vpop.f32.mrb[0].mxu0
    %v303 = vpop.f32.mrb[0].mxu0
    %304 = vdwg.mxu0
    %v305 = vadd.f32 %v94, %v259
    %v306 = vxor.u32 %v305, 2147483648
    %v307 = vmul.f32 %v306, 1.442695
    %v308 = vpow.pop %v307
    %v309 = vadd.f32 %v308, 1.0
    %v310 = vrcp.pop %v309
    %v311 = vmul.f32 1.0, %v310
    %v313 = vrot.slane %v94, 2
    %v315 = vadd.f32 %v313, %v261
    %v316 = vxor.u32 %v315, 2147483648
    %v317 = vmul.f32 %v316, 1.442695
    %v318 = vpow.pop %v317
    %v319 = vadd.f32 %v318, 1.0
    %v320 = vrcp.pop %v319
    %v321 = vmul.f32 1.0, %v320
    %v322 = vadd.f32 %v300, %v90
    %v323 = vmul.f32 %v311, %v322
    %v324 = vrot.slane %v94, 4
    %v326 = vadd.f32 %v324, %v323
    %v327 = vtanh.pop %v326
    %v328 = vsub.f32 %v92, %v327
    %v329 = vmul.f32 %v321, %v328
    %v330 = vadd.f32 %v327, %v329
    %331 = vst [vmem:[#allocation8] sm:$0x3] %v330
    %s332 = scalar_lea.vmem [#allocation3], 3
    %v333 = vld [vmem:[%s332] sm:$0x7]
    %v334 = vunpack.c.l.bf16 %v333
    %v335 = vpack.c.bf16 %v330, %v330
    %336 = vmatprep.subr.bf16.mxu0 %v177
    %337 = vmatpush1.bf16.msra.mxu0 %v176
    %338 = vmatprep.subr.bf16.mxu0 %v180
    %339 = vmatpush1.bf16.msra.mxu0 %v179
    %340 = vmatprep.subr.bf16.mxu0 %v183
    %341 = vmatpush1.bf16.msra.mxu0 %v182
    %342 = vmatprep.subr.bf16.mxu0 %v186
    %343 = vmatpush1.bf16.msra.mxu0 %v185
    %344 = vmatprep.subr.bf16.mxu0 %v189
    %345 = vmatpush1.bf16.msra.mxu0 %v188
    %346 = vmatprep.subr.bf16.mxu0 %v192
    %347 = vmatpush1.bf16.msra.mxu0 %v191
    %348 = vmatprep.subr.bf16.mxu0 %v195
    %349 = vmatpush1.bf16.msra.mxu0 %v194
    %350 = vmatprep.subr.bf16.mxu0 %v198
    %351 = vmatpush1.bf16.msra.mxu0 %v197
    %352 = vmatprep.subr.bf16.mxu0 0
    %353 = vmatpush1.bf16.msra.mxu0 0
    %354 = vmatprep.subr.bf16.mxu0 0
    %355 = vmatpush1.bf16.msra.mxu0 0
    %356 = vmatprep.subr.bf16.mxu0 0
    %357 = vmatpush1.bf16.msra.mxu0 0
    %358 = vmatprep.subr.bf16.mxu0 0
    %359 = vmatpush1.bf16.msra.mxu0 0
    %360 = vmatprep.subr.bf16.mxu0 0
    %361 = vmatpush1.bf16.msra.mxu0 0
    %362 = vmatprep.subr.bf16.mxu0 0
    %363 = vmatpush1.bf16.msra.mxu0 0
    %364 = vmatprep.subr.bf16.mxu0 0
    %365 = vmatpush1.bf16.msra.mxu0 0
    %366 = vmatprep.subr.bf16.mxu0 0
    %367 = vmatpush1.bf16.msra.mxu0 0
    %368 = vmatprep.mubr.bf16.mxu0 0
    %369 = vmatmul.mubr.bf16.gmra.mrb[0].mxu0 %v335
    %v370 = vpop.f32.mrb[0].mxu0
    %v371 = vadd.f32 0.0, %v370
    %v372 = vpop.f32.mrb[0].mxu0
    %v373 = vadd.f32 0.0, %v372
    %v374 = vpop.f32.mrb[0].mxu0
    %v375 = vpop.f32.mrb[0].mxu0
    %376 = vdwg.mxu0
    %377 = vmatprep.subr.bf16.mxu0 0
    %378 = vmatpush1.bf16.msra.mxu0 %v178
    %379 = vmatprep.subr.bf16.mxu0 0
    %380 = vmatpush1.bf16.msra.mxu0 %v181
    %381 = vmatprep.subr.bf16.mxu0 0
    %382 = vmatpush1.bf16.msra.mxu0 %v184
    %383 = vmatprep.subr.bf16.mxu0 0
    %384 = vmatpush1.bf16.msra.mxu0 %v187
    %385 = vmatprep.subr.bf16.mxu0 0
    %386 = vmatpush1.bf16.msra.mxu0 %v190
    %387 = vmatprep.subr.bf16.mxu0 0
    %388 = vmatpush1.bf16.msra.mxu0 %v193
    %389 = vmatprep.subr.bf16.mxu0 0
    %390 = vmatpush1.bf16.msra.mxu0 %v196
    %391 = vmatprep.subr.bf16.mxu0 0
    %392 = vmatpush1.bf16.msra.mxu0 %v199
    %393 = vmatprep.subr.bf16.mxu0 0
    %394 = vmatpush1.bf16.msra.mxu0 0
    %395 = vmatprep.subr.bf16.mxu0 0
    %396 = vmatpush1.bf16.msra.mxu0 0
    %397 = vmatprep.subr.bf16.mxu0 0
    %398 = vmatpush1.bf16.msra.mxu0 0
    %399 = vmatprep.subr.bf16.mxu0 0
    %400 = vmatpush1.bf16.msra.mxu0 0
    %401 = vmatprep.subr.bf16.mxu0 0
    %402 = vmatpush1.bf16.msra.mxu0 0
    %403 = vmatprep.subr.bf16.mxu0 0
    %404 = vmatpush1.bf16.msra.mxu0 0
    %405 = vmatprep.subr.bf16.mxu0 0
    %406 = vmatpush1.bf16.msra.mxu0 0
    %407 = vmatprep.subr.bf16.mxu0 0
    %408 = vmatpush1.bf16.msra.mxu0 0
    %409 = vmatprep.mubr.bf16.mxu0 0
    %410 = vmatmul.mubr.bf16.gmra.mrb[0].mxu0 %v335
    %v411 = vpop.f32.mrb[0].mxu0
    %v412 = vadd.f32 0.0, %v411
    %v413 = vpop.f32.mrb[0].mxu0
    %v414 = vpop.f32.mrb[0].mxu0
    %v415 = vpop.f32.mrb[0].mxu0
    %416 = vdwg.mxu0
    %v417 = vadd.f32 %v334, %v371
    %v418 = vxor.u32 %v417, 2147483648
    %v419 = vmul.f32 %v418, 1.442695
    %v420 = vpow.pop %v419
    %v421 = vadd.f32 %v420, 1.0
    %v422 = vrcp.pop %v421
    %v423 = vmul.f32 1.0, %v422
    %v425 = vrot.slane %v334, 2
    %v427 = vadd.f32 %v425, %v373
    %v428 = vxor.u32 %v427, 2147483648
    %v429 = vmul.f32 %v428, 1.442695
    %v430 = vpow.pop %v429
    %v431 = vadd.f32 %v430, 1.0
    %v432 = vrcp.pop %v431
    %v433 = vmul.f32 1.0, %v432
    %v434 = vadd.f32 %v412, %v90
    %v435 = vmul.f32 %v423, %v434
    %v436 = vrot.slane %v334, 4
    %v438 = vadd.f32 %v436, %v435
    %v439 = vtanh.pop %v438
    %v440 = vsub.f32 %v330, %v439
    %v441 = vmul.f32 %v433, %v440
    %v442 = vadd.f32 %v439, %v441
    %s443 = scalar_lea.vmem [#allocation8], 2
    %444 = vst [vmem:[%s443] sm:$0x3] %v442
    %s445 = scalar_lea.vmem [#allocation3], 6
    %v446 = vld [vmem:[%s445] sm:$0x7]
    %v447 = vunpack.c.l.bf16 %v446
    %v448 = vpack.c.bf16 %v442, %v442
    %449 = vmatprep.subr.bf16.mxu0 %v177
    %450 = vmatpush1.bf16.msra.mxu0 %v176
    %451 = vmatprep.subr.bf16.mxu0 %v180
    %452 = vmatpush1.bf16.msra.mxu0 %v179
    %453 = vmatprep.subr.bf16.mxu0 %v183
    %454 = vmatpush1.bf16.msra.mxu0 %v182
    %455 = vmatprep.subr.bf16.mxu0 %v186
    %456 = vmatpush1.bf16.msra.mxu0 %v185
    %457 = vmatprep.subr.bf16.mxu0 %v189
    %458 = vmatpush1.bf16.msra.mxu0 %v188
    %459 = vmatprep.subr.bf16.mxu0 %v192
    %460 = vmatpush1.bf16.msra.mxu0 %v191
    %461 = vmatprep.subr.bf16.mxu0 %v195
    %462 = vmatpush1.bf16.msra.mxu0 %v194
    %463 = vmatprep.subr.bf16.mxu0 %v198
    %464 = vmatpush1.bf16.msra.mxu0 %v197
    %465 = vmatprep.subr.bf16.mxu0 0
    %466 = vmatpush1.bf16.msra.mxu0 0
    %467 = vmatprep.subr.bf16.mxu0 0
    %468 = vmatpush1.bf16.msra.mxu0 0
    %469 = vmatprep.subr.bf16.mxu0 0
    %470 = vmatpush1.bf16.msra.mxu0 0
    %471 = vmatprep.subr.bf16.mxu0 0
    %472 = vmatpush1.bf16.msra.mxu0 0
    %473 = vmatprep.subr.bf16.mxu0 0
    %474 = vmatpush1.bf16.msra.mxu0 0
    %475 = vmatprep.subr.bf16.mxu0 0
    %476 = vmatpush1.bf16.msra.mxu0 0
    %477 = vmatprep.subr.bf16.mxu0 0
    %478 = vmatpush1.bf16.msra.mxu0 0
    %479 = vmatprep.subr.bf16.mxu0 0
    %480 = vmatpush1.bf16.msra.mxu0 0
    %481 = vmatprep.mubr.bf16.mxu0 0
    %482 = vmatmul.mubr.bf16.gmra.mrb[0].mxu0 %v448
    %v483 = vpop.f32.mrb[0].mxu0
    %v484 = vadd.f32 0.0, %v483
    %v485 = vpop.f32.mrb[0].mxu0
    %v486 = vadd.f32 0.0, %v485
    %v487 = vpop.f32.mrb[0].mxu0
    %v488 = vpop.f32.mrb[0].mxu0
    %489 = vdwg.mxu0
    %490 = vmatprep.subr.bf16.mxu0 0
    %491 = vmatpush1.bf16.msra.mxu0 %v178
    %492 = vmatprep.subr.bf16.mxu0 0
    %493 = vmatpush1.bf16.msra.mxu0 %v181
    %494 = vmatprep.subr.bf16.mxu0 0
    %495 = vmatpush1.bf16.msra.mxu0 %v184
    %496 = vmatprep.subr.bf16.mxu0 0
    %497 = vmatpush1.bf16.msra.mxu0 %v187
    %498 = vmatprep.subr.bf16.mxu0 0
    %499 = vmatpush1.bf16.msra.mxu0 %v190
    %500 = vmatprep.subr.bf16.mxu0 0
    %501 = vmatpush1.bf16.msra.mxu0 %v193
    %502 = vmatprep.subr.bf16.mxu0 0
    %503 = vmatpush1.bf16.msra.mxu0 %v196
    %504 = vmatprep.subr.bf16.mxu0 0
    %505 = vmatpush1.bf16.msra.mxu0 %v199
    %506 = vmatprep.subr.bf16.mxu0 0
    %507 = vmatpush1.bf16.msra.mxu0 0
    %508 = vmatprep.subr.bf16.mxu0 0
    %509 = vmatpush1.bf16.msra.mxu0 0
    %510 = vmatprep.subr.bf16.mxu0 0
    %511 = vmatpush1.bf16.msra.mxu0 0
    %512 = vmatprep.subr.bf16.mxu0 0
    %513 = vmatpush1.bf16.msra.mxu0 0
    %514 = vmatprep.subr.bf16.mxu0 0
    %515 = vmatpush1.bf16.msra.mxu0 0
    %516 = vmatprep.subr.bf16.mxu0 0
    %517 = vmatpush1.bf16.msra.mxu0 0
    %518 = vmatprep.subr.bf16.mxu0 0
    %519 = vmatpush1.bf16.msra.mxu0 0
    %520 = vmatprep.subr.bf16.mxu0 0
    %521 = vmatpush1.bf16.msra.mxu0 0
    %522 = vmatprep.mubr.bf16.mxu0 0
    %523 = vmatmul.mubr.bf16.gmra.mrb[0].mxu0 %v448
    %v524 = vpop.f32.mrb[0].mxu0
    %v525 = vadd.f32 0.0, %v524
    %v526 = vpop.f32.mrb[0].mxu0
    %v527 = vpop.f32.mrb[0].mxu0
    %v528 = vpop.f32.mrb[0].mxu0
    %529 = vdwg.mxu0
    %v530 = vadd.f32 %v447, %v484
    %v531 = vxor.u32 %v530, 2147483648
    %v532 = vmul.f32 %v531, 1.442695
    %v533 = vpow.pop %v532
    %v534 = vadd.f32 %v533, 1.0
    %v535 = vrcp.pop %v534
    %v536 = vmul.f32 1.0, %v535
    %v538 = vrot.slane %v447, 2
    %v540 = vadd.f32 %v538, %v486
    %v541 = vxor.u32 %v540, 2147483648
    %v542 = vmul.f32 %v541, 1.442695
    %v543 = vpow.pop %v542
    %v544 = vadd.f32 %v543, 1.0
    %v545 = vrcp.pop %v544
    %v546 = vmul.f32 1.0, %v545
    %v547 = vadd.f32 %v525, %v90
    %v548 = vmul.f32 %v536, %v547
    %v549 = vrot.slane %v447, 4
    %v551 = vadd.f32 %v549, %v548
    %v552 = vtanh.pop %v551
    %v553 = vsub.f32 %v442, %v552
    %v554 = vmul.f32 %v546, %v553
    %v555 = vadd.f32 %v552, %v554
    %s556 = scalar_lea.vmem [#allocation8], 4
    %557 = vst [vmem:[%s556] sm:$0x3] %v555
    %s558 = scalar_lea.vmem [#allocation3], 9
    %v559 = vld [vmem:[%s558] sm:$0x7]
    %v560 = vunpack.c.l.bf16 %v559
    %v561 = vpack.c.bf16 %v555, %v555
    %562 = vmatprep.subr.bf16.mxu0 %v177
    %563 = vmatpush1.bf16.msra.mxu0 %v176
    %564 = vmatprep.subr.bf16.mxu0 %v180
    %565 = vmatpush1.bf16.msra.mxu0 %v179
    %566 = vmatprep.subr.bf16.mxu0 %v183
    %567 = vmatpush1.bf16.msra.mxu0 %v182
    %568 = vmatprep.subr.bf16.mxu0 %v186
    %569 = vmatpush1.bf16.msra.mxu0 %v185
    %570 = vmatprep.subr.bf16.mxu0 %v189
    %571 = vmatpush1.bf16.msra.mxu0 %v188
    %572 = vmatprep.subr.bf16.mxu0 %v192
    %573 = vmatpush1.bf16.msra.mxu0 %v191
    %574 = vmatprep.subr.bf16.mxu0 %v195
    %575 = vmatpush1.bf16.msra.mxu0 %v194
    %576 = vmatprep.subr.bf16.mxu0 %v198
    %577 = vmatpush1.bf16.msra.mxu0 %v197
    %578 = vmatprep.subr.bf16.mxu0 0
    %579 = vmatpush1.bf16.msra.mxu0 0
    %580 = vmatprep.subr.bf16.mxu0 0
    %581 = vmatpush1.bf16.msra.mxu0 0
    %582 = vmatprep.subr.bf16.mxu0 0
    %583 = vmatpush1.bf16.msra.mxu0 0
    %584 = vmatprep.subr.bf16.mxu0 0
    %585 = vmatpush1.bf16.msra.mxu0 0
    %586 = vmatprep.subr.bf16.mxu0 0
    %587 = vmatpush1.bf16.msra.mxu0 0
    %588 = vmatprep.subr.bf16.mxu0 0
    %589 = vmatpush1.bf16.msra.mxu0 0
    %590 = vmatprep.subr.bf16.mxu0 0
    %591 = vmatpush1.bf16.msra.mxu0 0
    %592 = vmatprep.subr.bf16.mxu0 0
    %593 = vmatpush1.bf16.msra.mxu0 0
    %594 = vmatprep.mubr.bf16.mxu0 0
    %595 = vmatmul.mubr.bf16.gmra.mrb[0].mxu0 %v561
    %v596 = vpop.f32.mrb[0].mxu0
    %v597 = vadd.f32 0.0, %v596
    %v598 = vpop.f32.mrb[0].mxu0
    %v599 = vadd.f32 0.0, %v598
    %v600 = vpop.f32.mrb[0].mxu0
    %v601 = vpop.f32.mrb[0].mxu0
    %602 = vdwg.mxu0
    %603 = vmatprep.subr.bf16.mxu0 0
    %604 = vmatpush1.bf16.msra.mxu0 %v178
    %605 = vmatprep.subr.bf16.mxu0 0
    %606 = vmatpush1.bf16.msra.mxu0 %v181
    %607 = vmatprep.subr.bf16.mxu0 0
    %608 = vmatpush1.bf16.msra.mxu0 %v184
    %609 = vmatprep.subr.bf16.mxu0 0
    %610 = vmatpush1.bf16.msra.mxu0 %v187
    %611 = vmatprep.subr.bf16.mxu0 0
    %612 = vmatpush1.bf16.msra.mxu0 %v190
    %613 = vmatprep.subr.bf16.mxu0 0
    %614 = vmatpush1.bf16.msra.mxu0 %v193
    %615 = vmatprep.subr.bf16.mxu0 0
    %616 = vmatpush1.bf16.msra.mxu0 %v196
    %617 = vmatprep.subr.bf16.mxu0 0
    %618 = vmatpush1.bf16.msra.mxu0 %v199
    %619 = vmatprep.subr.bf16.mxu0 0
    %620 = vmatpush1.bf16.msra.mxu0 0
    %621 = vmatprep.subr.bf16.mxu0 0
    %622 = vmatpush1.bf16.msra.mxu0 0
    %623 = vmatprep.subr.bf16.mxu0 0
    %624 = vmatpush1.bf16.msra.mxu0 0
    %625 = vmatprep.subr.bf16.mxu0 0
    %626 = vmatpush1.bf16.msra.mxu0 0
    %627 = vmatprep.subr.bf16.mxu0 0
    %628 = vmatpush1.bf16.msra.mxu0 0
    %629 = vmatprep.subr.bf16.mxu0 0
    %630 = vmatpush1.bf16.msra.mxu0 0
    %631 = vmatprep.subr.bf16.mxu0 0
    %632 = vmatpush1.bf16.msra.mxu0 0
    %633 = vmatprep.subr.bf16.mxu0 0
    %634 = vmatpush1.bf16.msra.mxu0 0
    %635 = vmatprep.mubr.bf16.mxu0 0
    %636 = vmatmul.mubr.bf16.gmra.mrb[0].mxu0 %v561
    %v637 = vpop.f32.mrb[0].mxu0
    %v638 = vadd.f32 0.0, %v637
    %v639 = vpop.f32.mrb[0].mxu0
    %v640 = vpop.f32.mrb[0].mxu0
    %v641 = vpop.f32.mrb[0].mxu0
    %642 = vdwg.mxu0
    %v643 = vadd.f32 %v560, %v597
    %v644 = vxor.u32 %v643, 2147483648
    %v645 = vmul.f32 %v644, 1.442695
    %v646 = vpow.pop %v645
    %v647 = vadd.f32 %v646, 1.0
    %v648 = vrcp.pop %v647
    %v649 = vmul.f32 1.0, %v648
    %v651 = vrot.slane %v560, 2
    %v653 = vadd.f32 %v651, %v599
    %v654 = vxor.u32 %v653, 2147483648
    %v655 = vmul.f32 %v654, 1.442695
    %v656 = vpow.pop %v655
    %v657 = vadd.f32 %v656, 1.0
    %v658 = vrcp.pop %v657
    %v659 = vmul.f32 1.0, %v658
    %v660 = vadd.f32 %v638, %v90
    %v661 = vmul.f32 %v649, %v660
    %v662 = vrot.slane %v560, 4
    %v664 = vadd.f32 %v662, %v661
    %v665 = vtanh.pop %v664
    %v666 = vsub.f32 %v555, %v665
    %v667 = vmul.f32 %v659, %v666
    %v668 = vadd.f32 %v665, %v667
    %s669 = scalar_lea.vmem [#allocation8], 6
    %670 = vst [vmem:[%s669] sm:$0x3] %v668
    %s671 = scalar_lea.vmem [#allocation3], 12
    %v672 = vld [vmem:[%s671] sm:$0x7]
    %v673 = vunpack.c.l.bf16 %v672
    %v674 = vpack.c.bf16 %v668, %v668
    %675 = vmatprep.subr.bf16.mxu0 %v177
    %676 = vmatpush1.bf16.msra.mxu0 %v176
    %677 = vmatprep.subr.bf16.mxu0 %v180
    %678 = vmatpush1.bf16.msra.mxu0 %v179
    %679 = vmatprep.subr.bf16.mxu0 %v183
    %680 = vmatpush1.bf16.msra.mxu0 %v182
    %681 = vmatprep.subr.bf16.mxu0 %v186
    %682 = vmatpush1.bf16.msra.mxu0 %v185
    %683 = vmatprep.subr.bf16.mxu0 %v189
    %684 = vmatpush1.bf16.msra.mxu0 %v188
    %685 = vmatprep.subr.bf16.mxu0 %v192
    %686 = vmatpush1.bf16.msra.mxu0 %v191
    %687 = vmatprep.subr.bf16.mxu0 %v195
    %688 = vmatpush1.bf16.msra.mxu0 %v194
    %689 = vmatprep.subr.bf16.mxu0 %v198
    %690 = vmatpush1.bf16.msra.mxu0 %v197
    %691 = vmatprep.subr.bf16.mxu0 0
    %692 = vmatpush1.bf16.msra.mxu0 0
    %693 = vmatprep.subr.bf16.mxu0 0
    %694 = vmatpush1.bf16.msra.mxu0 0
    %695 = vmatprep.subr.bf16.mxu0 0
    %696 = vmatpush1.bf16.msra.mxu0 0
    %697 = vmatprep.subr.bf16.mxu0 0
    %698 = vmatpush1.bf16.msra.mxu0 0
    %699 = vmatprep.subr.bf16.mxu0 0
    %700 = vmatpush1.bf16.msra.mxu0 0
    %701 = vmatprep.subr.bf16.mxu0 0
    %702 = vmatpush1.bf16.msra.mxu0 0
    %703 = vmatprep.subr.bf16.mxu0 0
    %704 = vmatpush1.bf16.msra.mxu0 0
    %705 = vmatprep.subr.bf16.mxu0 0
    %706 = vmatpush1.bf16.msra.mxu0 0
    %707 = vmatprep.mubr.bf16.mxu0 0
    %708 = vmatmul.mubr.bf16.gmra.mrb[0].mxu0 %v674
    %v709 = vpop.f32.mrb[0].mxu0
    %v710 = vadd.f32 0.0, %v709
    %v711 = vpop.f32.mrb[0].mxu0
    %v712 = vadd.f32 0.0, %v711
    %v713 = vpop.f32.mrb[0].mxu0
    %v714 = vpop.f32.mrb[0].mxu0
    %715 = vdwg.mxu0
    %716 = vmatprep.subr.bf16.mxu0 0
    %717 = vmatpush1.bf16.msra.mxu0 %v178
    %718 = vmatprep.subr.bf16.mxu0 0
    %719 = vmatpush1.bf16.msra.mxu0 %v181
    %720 = vmatprep.subr.bf16.mxu0 0
    %721 = vmatpush1.bf16.msra.mxu0 %v184
    %722 = vmatprep.subr.bf16.mxu0 0
    %723 = vmatpush1.bf16.msra.mxu0 %v187
    %724 = vmatprep.subr.bf16.mxu0 0
    %725 = vmatpush1.bf16.msra.mxu0 %v190
    %726 = vmatprep.subr.bf16.mxu0 0
    %727 = vmatpush1.bf16.msra.mxu0 %v193
    %728 = vmatprep.subr.bf16.mxu0 0
    %729 = vmatpush1.bf16.msra.mxu0 %v196
    %730 = vmatprep.subr.bf16.mxu0 0
    %731 = vmatpush1.bf16.msra.mxu0 %v199
    %732 = vmatprep.subr.bf16.mxu0 0
    %733 = vmatpush1.bf16.msra.mxu0 0
    %734 = vmatprep.subr.bf16.mxu0 0
    %735 = vmatpush1.bf16.msra.mxu0 0
    %736 = vmatprep.subr.bf16.mxu0 0
    %737 = vmatpush1.bf16.msra.mxu0 0
    %738 = vmatprep.subr.bf16.mxu0 0
    %739 = vmatpush1.bf16.msra.mxu0 0
    %740 = vmatprep.subr.bf16.mxu0 0
    %741 = vmatpush1.bf16.msra.mxu0 0
    %742 = vmatprep.subr.bf16.mxu0 0
    %743 = vmatpush1.bf16.msra.mxu0 0
    %744 = vmatprep.subr.bf16.mxu0 0
    %745 = vmatpush1.bf16.msra.mxu0 0
    %746 = vmatprep.subr.bf16.mxu0 0
    %747 = vmatpush1.bf16.msra.mxu0 0
    %748 = vmatprep.mubr.bf16.mxu0 0
    %749 = vmatmul.mubr.bf16.gmra.mrb[0].mxu0 %v674
    %v750 = vpop.f32.mrb[0].mxu0
    %v751 = vadd.f32 0.0, %v750
    %v752 = vpop.f32.mrb[0].mxu0
    %v753 = vpop.f32.mrb[0].mxu0
    %v754 = vpop.f32.mrb[0].mxu0
    %755 = vdwg.mxu0
    %v756 = vadd.f32 %v673, %v710
    %v757 = vxor.u32 %v756, 2147483648
    %v758 = vmul.f32 %v757, 1.442695
    %v759 = vpow.pop %v758
    %v760 = vadd.f32 %v759, 1.0
    %v761 = vrcp.pop %v760
    %v762 = vmul.f32 1.0, %v761
    %v764 = vrot.slane %v673, 2
    %v766 = vadd.f32 %v764, %v712
    %v767 = vxor.u32 %v766, 2147483648
    %v768 = vmul.f32 %v767, 1.442695
    %v769 = vpow.pop %v768
    %v770 = vadd.f32 %v769, 1.0
    %v771 = vrcp.pop %v770
    %v772 = vmul.f32 1.0, %v771
    %v773 = vadd.f32 %v751, %v90
    %v774 = vmul.f32 %v762, %v773
    %v775 = vrot.slane %v673, 4
    %v777 = vadd.f32 %v775, %v774
    %v778 = vtanh.pop %v777
    %v779 = vsub.f32 %v668, %v778
    %v780 = vmul.f32 %v772, %v779
    %v781 = vadd.f32 %v778, %v780
    %s782 = scalar_lea.vmem [#allocation8], 8
    %783 = vst [vmem:[%s782] sm:$0x3] %v781
    %s784 = scalar_lea.vmem [#allocation3], 15
    %v785 = vld [vmem:[%s784] sm:$0x7]
    %v786 = vunpack.c.l.bf16 %v785
    %v787 = vpack.c.bf16 %v781, %v781
    %788 = vmatprep.subr.bf16.mxu0 %v177
    %789 = vmatpush1.bf16.msra.mxu0 %v176
    %790 = vmatprep.subr.bf16.mxu0 %v180
    %791 = vmatpush1.bf16.msra.mxu0 %v179
    %792 = vmatprep.subr.bf16.mxu0 %v183
    %793 = vmatpush1.bf16.msra.mxu0 %v182
    %794 = vmatprep.subr.bf16.mxu0 %v186
    %795 = vmatpush1.bf16.msra.mxu0 %v185
    %796 = vmatprep.subr.bf16.mxu0 %v189
    %797 = vmatpush1.bf16.msra.mxu0 %v188
    %798 = vmatprep.subr.bf16.mxu0 %v192
    %799 = vmatpush1.bf16.msra.mxu0 %v191
    %800 = vmatprep.subr.bf16.mxu0 %v195
    %801 = vmatpush1.bf16.msra.mxu0 %v194
    %802 = vmatprep.subr.bf16.mxu0 %v198
    %803 = vmatpush1.bf16.msra.mxu0 %v197
    %804 = vmatprep.subr.bf16.mxu0 0
    %805 = vmatpush1.bf16.msra.mxu0 0
    %806 = vmatprep.subr.bf16.mxu0 0
    %807 = vmatpush1.bf16.msra.mxu0 0
    %808 = vmatprep.subr.bf16.mxu0 0
    %809 = vmatpush1.bf16.msra.mxu0 0
    %810 = vmatprep.subr.bf16.mxu0 0
    %811 = vmatpush1.bf16.msra.mxu0 0
    %812 = vmatprep.subr.bf16.mxu0 0
    %813 = vmatpush1.bf16.msra.mxu0 0
    %814 = vmatprep.subr.bf16.mxu0 0
    %815 = vmatpush1.bf16.msra.mxu0 0
    %816 = vmatprep.subr.bf16.mxu0 0
    %817 = vmatpush1.bf16.msra.mxu0 0
    %818 = vmatprep.subr.bf16.mxu0 0
    %819 = vmatpush1.bf16.msra.mxu0 0
    %820 = vmatprep.mubr.bf16.mxu0 0
    %821 = vmatmul.mubr.bf16.gmra.mrb[0].mxu0 %v787
    %v822 = vpop.f32.mrb[0].mxu0
    %v823 = vadd.f32 0.0, %v822
    %v824 = vpop.f32.mrb[0].mxu0
    %v825 = vadd.f32 0.0, %v824
    %v826 = vpop.f32.mrb[0].mxu0
    %v827 = vpop.f32.mrb[0].mxu0
    %828 = vdwg.mxu0
    %829 = vmatprep.subr.bf16.mxu0 0
    %830 = vmatpush1.bf16.msra.mxu0 %v178
    %831 = vmatprep.subr.bf16.mxu0 0
    %832 = vmatpush1.bf16.msra.mxu0 %v181
    %833 = vmatprep.subr.bf16.mxu0 0
    %834 = vmatpush1.bf16.msra.mxu0 %v184
    %835 = vmatprep.subr.bf16.mxu0 0
    %836 = vmatpush1.bf16.msra.mxu0 %v187
    %837 = vmatprep.subr.bf16.mxu0 0
    %838 = vmatpush1.bf16.msra.mxu0 %v190
    %839 = vmatprep.subr.bf16.mxu0 0
    %840 = vmatpush1.bf16.msra.mxu0 %v193
    %841 = vmatprep.subr.bf16.mxu0 0
    %842 = vmatpush1.bf16.msra.mxu0 %v196
    %843 = vmatprep.subr.bf16.mxu0 0
    %844 = vmatpush1.bf16.msra.mxu0 %v199
    %845 = vmatprep.subr.bf16.mxu0 0
    %846 = vmatpush1.bf16.msra.mxu0 0
    %847 = vmatprep.subr.bf16.mxu0 0
    %848 = vmatpush1.bf16.msra.mxu0 0
    %849 = vmatprep.subr.bf16.mxu0 0
    %850 = vmatpush1.bf16.msra.mxu0 0
    %851 = vmatprep.subr.bf16.mxu0 0
    %852 = vmatpush1.bf16.msra.mxu0 0
    %853 = vmatprep.subr.bf16.mxu0 0
    %854 = vmatpush1.bf16.msra.mxu0 0
    %855 = vmatprep.subr.bf16.mxu0 0
    %856 = vmatpush1.bf16.msra.mxu0 0
    %857 = vmatprep.subr.bf16.mxu0 0
    %858 = vmatpush1.bf16.msra.mxu0 0
    %859 = vmatprep.subr.bf16.mxu0 0
    %860 = vmatpush1.bf16.msra.mxu0 0
    %861 = vmatprep.mubr.bf16.mxu0 0
    %862 = vmatmul.mubr.bf16.gmra.mrb[0].mxu0 %v787
    %v863 = vpop.f32.mrb[0].mxu0
    %v864 = vadd.f32 0.0, %v863
    %v865 = vpop.f32.mrb[0].mxu0
    %v866 = vpop.f32.mrb[0].mxu0
    %v867 = vpop.f32.mrb[0].mxu0
    %868 = vdwg.mxu0
    %v869 = vadd.f32 %v786, %v823
    %v870 = vxor.u32 %v869, 2147483648
    %v871 = vmul.f32 %v870, 1.442695
    %v872 = vpow.pop %v871
    %v873 = vadd.f32 %v872, 1.0
    %v874 = vrcp.pop %v873
    %v875 = vmul.f32 1.0, %v874
    %v877 = vrot.slane %v786, 2
    %v879 = vadd.f32 %v877, %v825
    %v880 = vxor.u32 %v879, 2147483648
    %v881 = vmul.f32 %v880, 1.442695
    %v882 = vpow.pop %v881
    %v883 = vadd.f32 %v882, 1.0
    %v884 = vrcp.pop %v883
    %v885 = vmul.f32 1.0, %v884
    %v886 = vadd.f32 %v864, %v90
    %v887 = vmul.f32 %v875, %v886
    %v888 = vrot.slane %v786, 4
    %v890 = vadd.f32 %v888, %v887
    %v891 = vtanh.pop %v890
    %v892 = vsub.f32 %v781, %v891
    %v893 = vmul.f32 %v885, %v892
    %v894 = vadd.f32 %v891, %v893
    %s895 = scalar_lea.vmem [#allocation8], 10
    %896 = vst [vmem:[%s895] sm:$0x3] %v894
    %s897 = scalar_lea.vmem [#allocation3], 18
    %v898 = vld [vmem:[%s897] sm:$0x7]
    %v899 = vunpack.c.l.bf16 %v898
    %v900 = vpack.c.bf16 %v894, %v894
    %901 = vmatprep.subr.bf16.mxu0 %v177
    %902 = vmatpush1.bf16.msra.mxu0 %v176
    %903 = vmatprep.subr.bf16.mxu0 %v180
    %904 = vmatpush1.bf16.msra.mxu0 %v179
    %905 = vmatprep.subr.bf16.mxu0 %v183
    %906 = vmatpush1.bf16.msra.mxu0 %v182
    %907 = vmatprep.subr.bf16.mxu0 %v186
    %908 = vmatpush1.bf16.msra.mxu0 %v185
    %909 = vmatprep.subr.bf16.mxu0 %v189
    %910 = vmatpush1.bf16.msra.mxu0 %v188
    %911 = vmatprep.subr.bf16.mxu0 %v192
    %912 = vmatpush1.bf16.msra.mxu0 %v191
    %913 = vmatprep.subr.bf16.mxu0 %v195
    %914 = vmatpush1.bf16.msra.mxu0 %v194
    %915 = vmatprep.subr.bf16.mxu0 %v198
    %916 = vmatpush1.bf16.msra.mxu0 %v197
    %917 = vmatprep.subr.bf16.mxu0 0
    %918 = vmatpush1.bf16.msra.mxu0 0
    %919 = vmatprep.subr.bf16.mxu0 0
    %920 = vmatpush1.bf16.msra.mxu0 0
    %921 = vmatprep.subr.bf16.mxu0 0
    %922 = vmatpush1.bf16.msra.mxu0 0
    %923 = vmatprep.subr.bf16.mxu0 0
    %924 = vmatpush1.bf16.msra.mxu0 0
    %925 = vmatprep.subr.bf16.mxu0 0
    %926 = vmatpush1.bf16.msra.mxu0 0
    %927 = vmatprep.subr.bf16.mxu0 0
    %928 = vmatpush1.bf16.msra.mxu0 0
    %929 = vmatprep.subr.bf16.mxu0 0
    %930 = vmatpush1.bf16.msra.mxu0 0
    %931 = vmatprep.subr.bf16.mxu0 0
    %932 = vmatpush1.bf16.msra.mxu0 0
    %933 = vmatprep.mubr.bf16.mxu0 0
    %934 = vmatmul.mubr.bf16.gmra.mrb[0].mxu0 %v900
    %v935 = vpop.f32.mrb[0].mxu0
    %v936 = vadd.f32 0.0, %v935
    %v937 = vpop.f32.mrb[0].mxu0
    %v938 = vadd.f32 0.0, %v937
    %v939 = vpop.f32.mrb[0].mxu0
    %v940 = vpop.f32.mrb[0].mxu0
    %941 = vdwg.mxu0
    %942 = vmatprep.subr.bf16.mxu0 0
    %943 = vmatpush1.bf16.msra.mxu0 %v178
    %944 = vmatprep.subr.bf16.mxu0 0
    %945 = vmatpush1.bf16.msra.mxu0 %v181
    %946 = vmatprep.subr.bf16.mxu0 0
    %947 = vmatpush1.bf16.msra.mxu0 %v184
    %948 = vmatprep.subr.bf16.mxu0 0
    %949 = vmatpush1.bf16.msra.mxu0 %v187
    %950 = vmatprep.subr.bf16.mxu0 0
    %951 = vmatpush1.bf16.msra.mxu0 %v190
    %952 = vmatprep.subr.bf16.mxu0 0
    %953 = vmatpush1.bf16.msra.mxu0 %v193
    %954 = vmatprep.subr.bf16.mxu0 0
    %955 = vmatpush1.bf16.msra.mxu0 %v196
    %956 = vmatprep.subr.bf16.mxu0 0
    %957 = vmatpush1.bf16.msra.mxu0 %v199
    %958 = vmatprep.subr.bf16.mxu0 0
    %959 = vmatpush1.bf16.msra.mxu0 0
    %960 = vmatprep.subr.bf16.mxu0 0
    %961 = vmatpush1.bf16.msra.mxu0 0
    %962 = vmatprep.subr.bf16.mxu0 0
    %963 = vmatpush1.bf16.msra.mxu0 0
    %964 = vmatprep.subr.bf16.mxu0 0
    %965 = vmatpush1.bf16.msra.mxu0 0
    %966 = vmatprep.subr.bf16.mxu0 0
    %967 = vmatpush1.bf16.msra.mxu0 0
    %968 = vmatprep.subr.bf16.mxu0 0
    %969 = vmatpush1.bf16.msra.mxu0 0
    %970 = vmatprep.subr.bf16.mxu0 0
    %971 = vmatpush1.bf16.msra.mxu0 0
    %972 = vmatprep.subr.bf16.mxu0 0
    %973 = vmatpush1.bf16.msra.mxu0 0
    %974 = vmatprep.mubr.bf16.mxu0 0
    %975 = vmatmul.mubr.bf16.gmra.mrb[0].mxu0 %v900
    %v976 = vpop.f32.mrb[0].mxu0
    %v977 = vadd.f32 0.0, %v976
    %v978 = vpop.f32.mrb[0].mxu0
    %v979 = vpop.f32.mrb[0].mxu0
    %v980 = vpop.f32.mrb[0].mxu0
    %981 = vdwg.mxu0
    %v982 = vadd.f32 %v899, %v936
    %v983 = vxor.u32 %v982, 2147483648
    %v984 = vmul.f32 %v983, 1.442695
    %v985 = vpow.pop %v984
    %v986 = vadd.f32 %v985, 1.0
    %v987 = vrcp.pop %v986
    %v988 = vmul.f32 1.0, %v987
    %v990 = vrot.slane %v899, 2
    %v992 = vadd.f32 %v990, %v938
    %v993 = vxor.u32 %v992, 2147483648
    %v994 = vmul.f32 %v993, 1.442695
    %v995 = vpow.pop %v994
    %v996 = vadd.f32 %v995, 1.0
    %v997 = vrcp.pop %v996
    %v998 = vmul.f32 1.0, %v997
    %v999 = vadd.f32 %v977, %v90
    %v1000 = vmul.f32 %v988, %v999
    %v1001 = vrot.slane %v899, 4
    %v1003 = vadd.f32 %v1001, %v1000
    %v1004 = vtanh.pop %v1003
    %v1005 = vsub.f32 %v894, %v1004
    %v1006 = vmul.f32 %v998, %v1005
    %v1007 = vadd.f32 %v1004, %v1006
    %s1008 = scalar_lea.vmem [#allocation8], 12
    %1009 = vst [vmem:[%s1008] sm:$0x3] %v1007
    %s1010 = scalar_lea.vmem [#allocation3], 21
    %v1011 = vld [vmem:[%s1010] sm:$0x7]
    %v1012 = vunpack.c.l.bf16 %v1011
    %v1013 = vpack.c.bf16 %v1007, %v1007
    %1014 = vmatprep.subr.bf16.mxu0 %v177
    %1015 = vmatpush1.bf16.msra.mxu0 %v176
    %1016 = vmatprep.subr.bf16.mxu0 %v180
    %1017 = vmatpush1.bf16.msra.mxu0 %v179
    %1018 = vmatprep.subr.bf16.mxu0 %v183
    %1019 = vmatpush1.bf16.msra.mxu0 %v182
    %1020 = vmatprep.subr.bf16.mxu0 %v186
    %1021 = vmatpush1.bf16.msra.mxu0 %v185
    %1022 = vmatprep.subr.bf16.mxu0 %v189
    %1023 = vmatpush1.bf16.msra.mxu0 %v188
    %1024 = vmatprep.subr.bf16.mxu0 %v192
    %1025 = vmatpush1.bf16.msra.mxu0 %v191
    %1026 = vmatprep.subr.bf16.mxu0 %v195
    %1027 = vmatpush1.bf16.msra.mxu0 %v194
    %1028 = vmatprep.subr.bf16.mxu0 %v198
    %1029 = vmatpush1.bf16.msra.mxu0 %v197
    %1030 = vmatprep.subr.bf16.mxu0 0
    %1031 = vmatpush1.bf16.msra.mxu0 0
    %1032 = vmatprep.subr.bf16.mxu0 0
    %1033 = vmatpush1.bf16.msra.mxu0 0
    %1034 = vmatprep.subr.bf16.mxu0 0
    %1035 = vmatpush1.bf16.msra.mxu0 0
    %1036 = vmatprep.subr.bf16.mxu0 0
    %1037 = vmatpush1.bf16.msra.mxu0 0
    %1038 = vmatprep.subr.bf16.mxu0 0
    %1039 = vmatpush1.bf16.msra.mxu0 0
    %1040 = vmatprep.subr.bf16.mxu0 0
    %1041 = vmatpush1.bf16.msra.mxu0 0
    %1042 = vmatprep.subr.bf16.mxu0 0
    %1043 = vmatpush1.bf16.msra.mxu0 0
    %1044 = vmatprep.subr.bf16.mxu0 0
    %1045 = vmatpush1.bf16.msra.mxu0 0
    %1046 = vmatprep.mubr.bf16.mxu0 0
    %1047 = vmatmul.mubr.bf16.gmra.mrb[0].mxu0 %v1013
    %v1048 = vpop.f32.mrb[0].mxu0
    %v1049 = vadd.f32 0.0, %v1048
    %v1050 = vpop.f32.mrb[0].mxu0
    %v1051 = vadd.f32 0.0, %v1050
    %v1052 = vpop.f32.mrb[0].mxu0
    %v1053 = vpop.f32.mrb[0].mxu0
    %1054 = vdwg.mxu0
    %1055 = vmatprep.subr.bf16.mxu0 0
    %1056 = vmatpush1.bf16.msra.mxu0 %v178
    %1057 = vmatprep.subr.bf16.mxu0 0
    %1058 = vmatpush1.bf16.msra.mxu0 %v181
    %1059 = vmatprep.subr.bf16.mxu0 0
    %1060 = vmatpush1.bf16.msra.mxu0 %v184
    %1061 = vmatprep.subr.bf16.mxu0 0
    %1062 = vmatpush1.bf16.msra.mxu0 %v187
    %1063 = vmatprep.subr.bf16.mxu0 0
    %1064 = vmatpush1.bf16.msra.mxu0 %v190
    %1065 = vmatprep.subr.bf16.mxu0 0
    %1066 = vmatpush1.bf16.msra.mxu0 %v193
    %1067 = vmatprep.subr.bf16.mxu0 0
    %1068 = vmatpush1.bf16.msra.mxu0 %v196
    %1069 = vmatprep.subr.bf16.mxu0 0
    %1070 = vmatpush1.bf16.msra.mxu0 %v199
    %1071 = vmatprep.subr.bf16.mxu0 0
    %1072 = vmatpush1.bf16.msra.mxu0 0
    %1073 = vmatprep.subr.bf16.mxu0 0
    %1074 = vmatpush1.bf16.msra.mxu0 0
    %1075 = vmatprep.subr.bf16.mxu0 0
    %1076 = vmatpush1.bf16.msra.mxu0 0
    %1077 = vmatprep.subr.bf16.mxu0 0
    %1078 = vmatpush1.bf16.msra.mxu0 0
    %1079 = vmatprep.subr.bf16.mxu0 0
    %1080 = vmatpush1.bf16.msra.mxu0 0
    %1081 = vmatprep.subr.bf16.mxu0 0
    %1082 = vmatpush1.bf16.msra.mxu0 0
    %1083 = vmatprep.subr.bf16.mxu0 0
    %1084 = vmatpush1.bf16.msra.mxu0 0
    %1085 = vmatprep.subr.bf16.mxu0 0
    %1086 = vmatpush1.bf16.msra.mxu0 0
    %1087 = vmatprep.mubr.bf16.mxu0 0
    %1088 = vmatmul.mubr.bf16.gmra.mrb[0].mxu0 %v1013
    %v1089 = vpop.f32.mrb[0].mxu0
    %v1090 = vadd.f32 0.0, %v1089
    %v1091 = vpop.f32.mrb[0].mxu0
    %v1092 = vpop.f32.mrb[0].mxu0
    %v1093 = vpop.f32.mrb[0].mxu0
    %1094 = vdwg.mxu0
    %v1095 = vadd.f32 %v1012, %v1049
    %v1096 = vxor.u32 %v1095, 2147483648
    %v1097 = vmul.f32 %v1096, 1.442695
    %v1098 = vpow.pop %v1097
    %v1099 = vadd.f32 %v1098, 1.0
    %v1100 = vrcp.pop %v1099
    %v1101 = vmul.f32 1.0, %v1100
    %v1103 = vrot.slane %v1012, 2
    %v1105 = vadd.f32 %v1103, %v1051
    %v1106 = vxor.u32 %v1105, 2147483648
    %v1107 = vmul.f32 %v1106, 1.442695
    %v1108 = vpow.pop %v1107
    %v1109 = vadd.f32 %v1108, 1.0
    %v1110 = vrcp.pop %v1109
    %v1111 = vmul.f32 1.0, %v1110
    %v1112 = vadd.f32 %v1090, %v90
    %v1113 = vmul.f32 %v1101, %v1112
    %v1114 = vrot.slane %v1012, 4
    %v1116 = vadd.f32 %v1114, %v1113
    %v1117 = vtanh.pop %v1116
    %v1118 = vsub.f32 %v1007, %v1117
    %v1119 = vmul.f32 %v1111, %v1118
    %v1120 = vadd.f32 %v1117, %v1119
    %s1121 = scalar_lea.vmem [#allocation8], 14
    %1122 = vst [vmem:[%s1121] sm:$0x3] %v1120
    %1123 = vst [vmem:[#allocation2] sm:$0x3] %v1120
    // Predicated region
    $region30: #{tpu_custom_call.1} parent=1 // pred_check
      _
    $region31: #{tpu_custom_call.1} parent=1 // pred_check_branch
      %1125 = sbr.rel (0) target = $region33
    $region32: #{tpu_custom_call.1} parent=1 // pred_region
      %s1127 = ssub.s32 256, 256
      %1128 = vsyncadd [#allocation5], %s1127
      %s1129 = sshll.u32 [#allocation8], 4
      %s1130 = int_to_ptr.vmem [resolvable:$true] %s1129
      %1135 = dma.vmem_to_hbm [thread:$0]  %s1130, 256, %s4, [#allocation5], 32, 32, 2
    $region33: #{tpu_custom_call.1} parent=1 // pred_fallthru
      _
    // Predicated region
    $region34: #{tpu_custom_call.1} parent=1 // pred_check
      _
    $region35: #{tpu_custom_call.1} parent=1 // pred_check_branch
      %1137 = sbr.rel (0) target = $region37
    $region36: #{tpu_custom_call.1} parent=1 // pred_region
      %1138 = dma.done [#allocation5], 256
    $region37: #{tpu_custom_call.1} parent=1 // pred_fallthru
      _
    %1139 = vsyncpa [#allocation4], 1
    %1140 = vsyncpa [#allocation7], 1
    %1141 = vsyncpa [#allocation5], 1

</llo_original>
